<compile_context>
chip_gen: v7x
topology: tpu7x:2x2x1
jax: 0.10.0
libtpu: 0.0.40
codegen_flags: <defaults>
</compile_context>

<pallas_src>
import functools

import jax
import jax.numpy as jnp
from jax.experimental import pallas as pl
from jax.experimental.pallas import tpu as pltpu


# -------------------- kernel --------------------

def _mha_kernel(x_ref, wkqv_ref, wp_ref, bp_ref, o_ref, *,
                num_heads, head_size, seq_len, batch_per_block):
    H, hd, T = num_heads, head_size, seq_len
    OD = H * hd

    x2d = x_ref[...]                                       # (R, C), R = batch_per_block * T

    # Single fused KQV projection: (R, C) @ (C, 3*OD).
    # Columns packed as [K(head-major) | Q(head-major, pre-scaled) | V(head-major)].
    kqv = jnp.dot(x2d, wkqv_ref[...], preferred_element_type=jnp.float32)

    # Causal mask, shared across batch items and heads (hoisted out of loops).
    row = jax.lax.broadcasted_iota(jnp.int32, (T, T), 0)
    col = jax.lax.broadcasted_iota(jnp.int32, (T, T), 1)
    causal = row >= col
    neg = jnp.float32(-1e30)     # finite sentinel: no NaN even if a row were fully masked

    bias = bp_ref[...]                                     # (1, OD)

    for b in range(batch_per_block):                       # static, tiny loops
        r0 = b * T
        acc = jnp.zeros((T, OD), jnp.float32)
        for h in range(H):
            c0 = h * hd
            kh = kqv[r0:r0 + T, c0:c0 + hd]                        # (T, hd)
            qh = kqv[r0:r0 + T, OD + c0:OD + c0 + hd]              # scale already folded in
            vh = kqv[r0:r0 + T, 2 * OD + c0:2 * OD + c0 + hd]

            s = jnp.dot(qh, kh.T, preferred_element_type=jnp.float32)   # (T, T)
            s = jnp.where(causal, s, neg)
            s = s - jnp.max(s, axis=-1, keepdims=True)
            p = jnp.exp(s)
            p = p * pl.reciprocal(jnp.sum(p, axis=-1, keepdims=True), approx=True)
            # TODO(synk): attention dropout / multi-head dropout are identity (eval / p=0).
            o_h = jnp.dot(p, vh, preferred_element_type=jnp.float32)    # (T, hd)
            # Per-head projection accumulation (weight-side head split, no concatenate).
            acc = acc + jnp.dot(o_h, wp_ref[h], preferred_element_type=jnp.float32)

        o_ref[r0:r0 + T, :] = (acc + bias).astype(o_ref.dtype)


# -------------------- wrapper --------------------

def _prefer_batch_grid():
    """True on chips with >1 TensorCore per device (v7x): keep the batch on a
    'parallel' grid axis.  On single-TC chips (v5e/v6e) fold the batch into
    the matmul M dimension instead (removes per-grid-step overhead)."""
    try:
        kind = jax.devices()[0].device_kind.lower()
    except Exception:
        return False
    return ("v7" in kind) or ("7x" in kind)


def multi_head_attention(x, params, *, num_heads, head_size, batch_on_grid=None):
    B, T, C = x.shape
    OD = num_heads * head_size
    if batch_on_grid is None:
        batch_on_grid = _prefer_batch_grid()
    nb = 1 if batch_on_grid else B          # batch items handled per grid step
    num_blocks = B // nb
    R = nb * T                              # rows per block (multiple of 8 since T=8)

    x2d = x.reshape(B * T, C)               # lane-last 2-D slab

    kernel = functools.partial(
        _mha_kernel, num_heads=num_heads, head_size=head_size,
        seq_len=T, batch_per_block=nb)

    out2d = pl.pallas_call(
        kernel,
        out_shape=jax.ShapeDtypeStruct((B * T, OD), x.dtype),
        grid_spec=pltpu.PrefetchScalarGridSpec(
            num_scalar_prefetch=0,
            grid=(num_blocks,),
            in_specs=[
                pl.BlockSpec((R, C), lambda i: (i, 0)),                         # x rows
                pl.BlockSpec((C, 3 * OD), lambda i: (0, 0)),                    # fused KQV weight
                pl.BlockSpec((num_heads, head_size, OD), lambda i: (0, 0, 0)),  # proj weight (head split)
                pl.BlockSpec((1, OD), lambda i: (0, 0)),                        # proj bias
            ],
            out_specs=pl.BlockSpec((R, OD), lambda i: (i, 0)),
        ),
        compiler_params=pltpu.CompilerParams(dimension_semantics=("parallel",)),
    )(x2d, params["wkqv"], params["wp"], params["bp"])

    return out2d.reshape(B, T, OD)


def pack_params(W_kqv, W_proj, b_proj, *, num_heads, head_size):
    """Repack PyTorch-layout weights for the kernel.

    In the torch module, output column j of (x @ W_kqv.T) maps to
    (head, dim, s) with s = j % 3 selecting key/query/value.  We de-interleave
    to [K | Q | V] column groups (head-major within each group) and fold the
    softmax scale into the Q columns.  The projection weight is pre-transposed
    and reshaped to (H, head_size, OD) so each head's block is a free static
    leading-index slice inside the kernel.
    """
    OD = num_heads * head_size
    C = W_kqv.shape[1]
    scale = head_size ** -0.5

    w = W_kqv.T.reshape(C, num_heads, head_size, 3)
    w = w.at[..., 1].multiply(scale)                       # fold scale into Q
    wkqv = jnp.transpose(w, (0, 3, 1, 2)).reshape(C, 3 * OD)

    wp = W_proj.T.reshape(num_heads, head_size, OD)        # (H, hd, OD)
    bp = b_proj.reshape(1, OD)
    return {"wkqv": wkqv, "wp": wp, "bp": bp}


# -------------------- pure-JAX reference (mirrors the PyTorch module) --------------------

def reference_mha(x, W_kqv, W_proj, b_proj, *, num_heads, head_size):
    B, T, C = x.shape
    OD = num_heads * head_size
    kqv = x @ W_kqv.T                                      # (B, T, 3*OD)
    kqv = kqv.reshape(B, T, num_heads, head_size, 3)
    keys = jnp.transpose(kqv[..., 0], (0, 2, 1, 3))        # (B, H, T, hd)
    queries = jnp.transpose(kqv[..., 1], (0, 2, 1, 3))
    values = jnp.transpose(kqv[..., 2], (0, 2, 1, 3))
    w = queries @ jnp.swapaxes(keys, -2, -1) * head_size ** -0.5
    mask = jnp.tril(jnp.ones((T, T)))
    w = jnp.where(mask == 0, -jnp.inf, w)
    w = jax.nn.softmax(w, axis=-1)
    res = w @ values                                       # (B, H, T, hd)
    res = jnp.transpose(res, (0, 2, 1, 3)).reshape(B, T, OD)
    return res @ W_proj.T + b_proj


# -------------------- main --------------------

if __name__ == "__main__":
    # Config consistent with the module: max_context_size >= T.
    B, T = 2, 8
    max_context_size = 16
    input_dim = 32
    num_heads = 4
    head_size = 8                       # output_dim = head_size * num_heads = 32
    output_dim = num_heads * head_size

    key = jax.random.PRNGKey(0)
    k0, k1, k2, k3 = jax.random.split(key, 4)
    x = jax.random.normal(k0, (B, T, input_dim), jnp.float32)

    scale = 0.1
    W_kqv = jax.random.normal(k1, (3 * output_dim, input_dim), jnp.float32) * scale
    W_proj = jax.random.normal(k2, (output_dim, output_dim), jnp.float32) * scale
    b_proj = jax.random.normal(k3, (output_dim,), jnp.float32) * scale

    params = pack_params(W_kqv, W_proj, b_proj,
                         num_heads=num_heads, head_size=head_size)

    out = multi_head_attention(x, params, num_heads=num_heads, head_size=head_size)
    out = jax.block_until_ready(out)

    ref = reference_mha(x, W_kqv, W_proj, b_proj,
                        num_heads=num_heads, head_size=head_size)
    ref = jax.block_until_ready(ref)

    assert out.shape == (B, T, output_dim)
    # Tolerance loosened slightly (2e-3) to accommodate the EUP approximate
    # reciprocal in the softmax and the scale folded into the Q weights.
    assert jnp.allclose(out, ref, atol=2e-3, rtol=2e-3), "mismatch vs reference"
    print("KERNEL_OK")
</pallas_src>

<mosaic_0001>
module attributes {stable_mosaic.version = 11 : i64} {
  func.func @_mha_kernel(%arg0: i32, %arg1: memref<16x32xf32, #tpu.memory_space<vmem>>, %arg2: memref<32x96xf32, #tpu.memory_space<vmem>>, %arg3: memref<4x8x32xf32, #tpu.memory_space<vmem>>, %arg4: memref<1x32xf32, #tpu.memory_space<vmem>>, %arg5: memref<16x32xf32, #tpu.memory_space<vmem>>) attributes {dimension_semantics = [#tpu.dimension_semantics<parallel>], iteration_bounds = array<i64: 1>, scalar_prefetch = 0 : i64, scratch_operands = 0 : i64, tpu.core_type = #tpu.core_type<tc>, window_params = [{transform_indices = @transform_0, window_bounds = array<i64: 16, 32>}, {pipeline_mode = #tpu.pipeline_mode<synchronous>, transform_indices = @transform_1, window_bounds = array<i64: 32, 96>}, {pipeline_mode = #tpu.pipeline_mode<synchronous>, transform_indices = @transform_2, window_bounds = array<i64: 4, 8, 32>}, {pipeline_mode = #tpu.pipeline_mode<synchronous>, transform_indices = @transform_3, window_bounds = array<i64: 1, 32>}, {transform_indices = @transform_4, window_bounds = array<i64: 16, 32>}]} {
    %c0 = arith.constant 0 : index
    %c0_0 = arith.constant 0 : index
    %0 = vector.load %arg1[%c0, %c0_0] : memref<16x32xf32, #tpu.memory_space<vmem>>, vector<16x32xf32>
    %c0_1 = arith.constant 0 : index
    %c0_2 = arith.constant 0 : index
    %1 = vector.load %arg2[%c0_1, %c0_2] : memref<32x96xf32, #tpu.memory_space<vmem>>, vector<32x96xf32>
    %cst = arith.constant dense<0.000000e+00> : vector<16x96xf32>
    %2 = tpu.matmul %0, %1, %cst {dimension_numbers = #tpu.dot_dimension_numbers<[1], [0], [0], [1], [0, 0, 1, 1], [], []>} : vector<16x32xf32>, vector<32x96xf32>, vector<16x96xf32> -> vector<16x96xf32>
    %3 = tpu.iota {dimensions = array<i32: 0>} : vector<8x8xi32>
    %4 = tpu.iota {dimensions = array<i32: 1>} : vector<8x8xi32>
    %5 = arith.cmpi sge, %3, %4 : vector<8x8xi32>
    %c0_3 = arith.constant 0 : index
    %c0_4 = arith.constant 0 : index
    %6 = vector.load %arg4[%c0_3, %c0_4] : memref<1x32xf32, #tpu.memory_space<vmem>>, vector<1x32xf32>
    %cst_5 = arith.constant 0.000000e+00 : f32
    %7 = vector.broadcast %cst_5 : f32 to vector<8x32xf32>
    %8 = vector.extract_strided_slice %2 {offsets = [0, 0], sizes = [8, 8], strides = [1, 1]} : vector<16x96xf32> to vector<8x8xf32>
    %9 = vector.extract_strided_slice %2 {offsets = [0, 32], sizes = [8, 8], strides = [1, 1]} : vector<16x96xf32> to vector<8x8xf32>
    %10 = vector.extract_strided_slice %2 {offsets = [0, 64], sizes = [8, 8], strides = [1, 1]} : vector<16x96xf32> to vector<8x8xf32>
    %11 = tpu.transpose %8, [1, 0] : vector<8x8xf32> -> vector<8x8xf32>
    %cst_6 = arith.constant dense<0.000000e+00> : vector<8x8xf32>
    %12 = tpu.matmul %9, %11, %cst_6 {dimension_numbers = #tpu.dot_dimension_numbers<[1], [0], [0], [1], [0, 0, 1, 1], [], []>} : vector<8x8xf32>, vector<8x8xf32>, vector<8x8xf32> -> vector<8x8xf32>
    %cst_7 = arith.constant -1.000000e+30 : f32
    %13 = vector.broadcast %cst_7 : f32 to vector<8x8xf32>
    %14 = arith.select %5, %12, %13 : vector<8x8xi1>, vector<8x8xf32>
    %cst_8 = arith.constant dense<0xFF800000> : vector<8xf32>
    %15 = vector.multi_reduction <maximumf>, %14, %cst_8 [1] : vector<8x8xf32> to vector<8xf32>
    %16 = vector.shape_cast %15 : vector<8xf32> to vector<8x1xf32>
    %17 = vector.broadcast %16 : vector<8x1xf32> to vector<8x8xf32>
    %18 = arith.subf %14, %17 : vector<8x8xf32>
    %19 = math.exp %18 : vector<8x8xf32>
    %cst_9 = arith.constant dense<0.000000e+00> : vector<8xf32>
    %20 = vector.multi_reduction <add>, %19, %cst_9 [1] : vector<8x8xf32> to vector<8xf32>
    %21 = vector.shape_cast %20 : vector<8xf32> to vector<8x1xf32>
    %22 = tpu.reciprocal %21 {approx = true} : vector<8x1xf32> -> vector<8x1xf32>
    %23 = vector.broadcast %22 : vector<8x1xf32> to vector<8x8xf32>
    %24 = arith.mulf %19, %23 : vector<8x8xf32>
    %cst_10 = arith.constant dense<0.000000e+00> : vector<8x8xf32>
    %25 = tpu.matmul %24, %10, %cst_10 {dimension_numbers = #tpu.dot_dimension_numbers<[1], [0], [0], [1], [0, 0, 1, 1], [], []>} : vector<8x8xf32>, vector<8x8xf32>, vector<8x8xf32> -> vector<8x8xf32>
    %c0_11 = arith.constant 0 : index
    %c0_12 = arith.constant 0 : index
    %c0_13 = arith.constant 0 : index
    %26 = vector.load %arg3[%c0_11, %c0_12, %c0_13] : memref<4x8x32xf32, #tpu.memory_space<vmem>>, vector<1x8x32xf32>
    %27 = vector.shape_cast %26 : vector<1x8x32xf32> to vector<8x32xf32>
    %cst_14 = arith.constant dense<0.000000e+00> : vector<8x32xf32>
    %28 = tpu.matmul %25, %27, %cst_14 {dimension_numbers = #tpu.dot_dimension_numbers<[1], [0], [0], [1], [0, 0, 1, 1], [], []>} : vector<8x8xf32>, vector<8x32xf32>, vector<8x32xf32> -> vector<8x32xf32>
    %29 = arith.addf %7, %28 : vector<8x32xf32>
    %30 = vector.extract_strided_slice %2 {offsets = [0, 8], sizes = [8, 8], strides = [1, 1]} : vector<16x96xf32> to vector<8x8xf32>
    %31 = vector.extract_strided_slice %2 {offsets = [0, 40], sizes = [8, 8], strides = [1, 1]} : vector<16x96xf32> to vector<8x8xf32>
    %32 = vector.extract_strided_slice %2 {offsets = [0, 72], sizes = [8, 8], strides = [1, 1]} : vector<16x96xf32> to vector<8x8xf32>
    %33 = tpu.transpose %30, [1, 0] : vector<8x8xf32> -> vector<8x8xf32>
    %cst_15 = arith.constant dense<0.000000e+00> : vector<8x8xf32>
    %34 = tpu.matmul %31, %33, %cst_15 {dimension_numbers = #tpu.dot_dimension_numbers<[1], [0], [0], [1], [0, 0, 1, 1], [], []>} : vector<8x8xf32>, vector<8x8xf32>, vector<8x8xf32> -> vector<8x8xf32>
    %cst_16 = arith.constant -1.000000e+30 : f32
    %35 = vector.broadcast %cst_16 : f32 to vector<8x8xf32>
    %36 = arith.select %5, %34, %35 : vector<8x8xi1>, vector<8x8xf32>
    %cst_17 = arith.constant dense<0xFF800000> : vector<8xf32>
    %37 = vector.multi_reduction <maximumf>, %36, %cst_17 [1] : vector<8x8xf32> to vector<8xf32>
    %38 = vector.shape_cast %37 : vector<8xf32> to vector<8x1xf32>
    %39 = vector.broadcast %38 : vector<8x1xf32> to vector<8x8xf32>
    %40 = arith.subf %36, %39 : vector<8x8xf32>
    %41 = math.exp %40 : vector<8x8xf32>
    %cst_18 = arith.constant dense<0.000000e+00> : vector<8xf32>
    %42 = vector.multi_reduction <add>, %41, %cst_18 [1] : vector<8x8xf32> to vector<8xf32>
    %43 = vector.shape_cast %42 : vector<8xf32> to vector<8x1xf32>
    %44 = tpu.reciprocal %43 {approx = true} : vector<8x1xf32> -> vector<8x1xf32>
    %45 = vector.broadcast %44 : vector<8x1xf32> to vector<8x8xf32>
    %46 = arith.mulf %41, %45 : vector<8x8xf32>
    %cst_19 = arith.constant dense<0.000000e+00> : vector<8x8xf32>
    %47 = tpu.matmul %46, %32, %cst_19 {dimension_numbers = #tpu.dot_dimension_numbers<[1], [0], [0], [1], [0, 0, 1, 1], [], []>} : vector<8x8xf32>, vector<8x8xf32>, vector<8x8xf32> -> vector<8x8xf32>
    %c1 = arith.constant 1 : index
    %c0_20 = arith.constant 0 : index
    %c0_21 = arith.constant 0 : index
    %48 = vector.load %arg3[%c1, %c0_20, %c0_21] : memref<4x8x32xf32, #tpu.memory_space<vmem>>, vector<1x8x32xf32>
    %49 = vector.shape_cast %48 : vector<1x8x32xf32> to vector<8x32xf32>
    %cst_22 = arith.constant dense<0.000000e+00> : vector<8x32xf32>
    %50 = tpu.matmul %47, %49, %cst_22 {dimension_numbers = #tpu.dot_dimension_numbers<[1], [0], [0], [1], [0, 0, 1, 1], [], []>} : vector<8x8xf32>, vector<8x32xf32>, vector<8x32xf32> -> vector<8x32xf32>
    %51 = arith.addf %29, %50 : vector<8x32xf32>
    %52 = vector.extract_strided_slice %2 {offsets = [0, 16], sizes = [8, 8], strides = [1, 1]} : vector<16x96xf32> to vector<8x8xf32>
    %53 = vector.extract_strided_slice %2 {offsets = [0, 48], sizes = [8, 8], strides = [1, 1]} : vector<16x96xf32> to vector<8x8xf32>
    %54 = vector.extract_strided_slice %2 {offsets = [0, 80], sizes = [8, 8], strides = [1, 1]} : vector<16x96xf32> to vector<8x8xf32>
    %55 = tpu.transpose %52, [1, 0] : vector<8x8xf32> -> vector<8x8xf32>
    %cst_23 = arith.constant dense<0.000000e+00> : vector<8x8xf32>
    %56 = tpu.matmul %53, %55, %cst_23 {dimension_numbers = #tpu.dot_dimension_numbers<[1], [0], [0], [1], [0, 0, 1, 1], [], []>} : vector<8x8xf32>, vector<8x8xf32>, vector<8x8xf32> -> vector<8x8xf32>
    %cst_24 = arith.constant -1.000000e+30 : f32
    %57 = vector.broadcast %cst_24 : f32 to vector<8x8xf32>
    %58 = arith.select %5, %56, %57 : vector<8x8xi1>, vector<8x8xf32>
    %cst_25 = arith.constant dense<0xFF800000> : vector<8xf32>
    %59 = vector.multi_reduction <maximumf>, %58, %cst_25 [1] : vector<8x8xf32> to vector<8xf32>
    %60 = vector.shape_cast %59 : vector<8xf32> to vector<8x1xf32>
    %61 = vector.broadcast %60 : vector<8x1xf32> to vector<8x8xf32>
    %62 = arith.subf %58, %61 : vector<8x8xf32>
    %63 = math.exp %62 : vector<8x8xf32>
    %cst_26 = arith.constant dense<0.000000e+00> : vector<8xf32>
    %64 = vector.multi_reduction <add>, %63, %cst_26 [1] : vector<8x8xf32> to vector<8xf32>
    %65 = vector.shape_cast %64 : vector<8xf32> to vector<8x1xf32>
    %66 = tpu.reciprocal %65 {approx = true} : vector<8x1xf32> -> vector<8x1xf32>
    %67 = vector.broadcast %66 : vector<8x1xf32> to vector<8x8xf32>
    %68 = arith.mulf %63, %67 : vector<8x8xf32>
    %cst_27 = arith.constant dense<0.000000e+00> : vector<8x8xf32>
    %69 = tpu.matmul %68, %54, %cst_27 {dimension_numbers = #tpu.dot_dimension_numbers<[1], [0], [0], [1], [0, 0, 1, 1], [], []>} : vector<8x8xf32>, vector<8x8xf32>, vector<8x8xf32> -> vector<8x8xf32>
    %c2 = arith.constant 2 : index
    %c0_28 = arith.constant 0 : index
    %c0_29 = arith.constant 0 : index
    %70 = vector.load %arg3[%c2, %c0_28, %c0_29] : memref<4x8x32xf32, #tpu.memory_space<vmem>>, vector<1x8x32xf32>
    %71 = vector.shape_cast %70 : vector<1x8x32xf32> to vector<8x32xf32>
    %cst_30 = arith.constant dense<0.000000e+00> : vector<8x32xf32>
    %72 = tpu.matmul %69, %71, %cst_30 {dimension_numbers = #tpu.dot_dimension_numbers<[1], [0], [0], [1], [0, 0, 1, 1], [], []>} : vector<8x8xf32>, vector<8x32xf32>, vector<8x32xf32> -> vector<8x32xf32>
    %73 = arith.addf %51, %72 : vector<8x32xf32>
    %74 = vector.extract_strided_slice %2 {offsets = [0, 24], sizes = [8, 8], strides = [1, 1]} : vector<16x96xf32> to vector<8x8xf32>
    %75 = vector.extract_strided_slice %2 {offsets = [0, 56], sizes = [8, 8], strides = [1, 1]} : vector<16x96xf32> to vector<8x8xf32>
    %76 = vector.extract_strided_slice %2 {offsets = [0, 88], sizes = [8, 8], strides = [1, 1]} : vector<16x96xf32> to vector<8x8xf32>
    %77 = tpu.transpose %74, [1, 0] : vector<8x8xf32> -> vector<8x8xf32>
    %cst_31 = arith.constant dense<0.000000e+00> : vector<8x8xf32>
    %78 = tpu.matmul %75, %77, %cst_31 {dimension_numbers = #tpu.dot_dimension_numbers<[1], [0], [0], [1], [0, 0, 1, 1], [], []>} : vector<8x8xf32>, vector<8x8xf32>, vector<8x8xf32> -> vector<8x8xf32>
    %cst_32 = arith.constant -1.000000e+30 : f32
    %79 = vector.broadcast %cst_32 : f32 to vector<8x8xf32>
    %80 = arith.select %5, %78, %79 : vector<8x8xi1>, vector<8x8xf32>
    %cst_33 = arith.constant dense<0xFF800000> : vector<8xf32>
    %81 = vector.multi_reduction <maximumf>, %80, %cst_33 [1] : vector<8x8xf32> to vector<8xf32>
    %82 = vector.shape_cast %81 : vector<8xf32> to vector<8x1xf32>
    %83 = vector.broadcast %82 : vector<8x1xf32> to vector<8x8xf32>
    %84 = arith.subf %80, %83 : vector<8x8xf32>
    %85 = math.exp %84 : vector<8x8xf32>
    %cst_34 = arith.constant dense<0.000000e+00> : vector<8xf32>
    %86 = vector.multi_reduction <add>, %85, %cst_34 [1] : vector<8x8xf32> to vector<8xf32>
    %87 = vector.shape_cast %86 : vector<8xf32> to vector<8x1xf32>
    %88 = tpu.reciprocal %87 {approx = true} : vector<8x1xf32> -> vector<8x1xf32>
    %89 = vector.broadcast %88 : vector<8x1xf32> to vector<8x8xf32>
    %90 = arith.mulf %85, %89 : vector<8x8xf32>
    %cst_35 = arith.constant dense<0.000000e+00> : vector<8x8xf32>
    %91 = tpu.matmul %90, %76, %cst_35 {dimension_numbers = #tpu.dot_dimension_numbers<[1], [0], [0], [1], [0, 0, 1, 1], [], []>} : vector<8x8xf32>, vector<8x8xf32>, vector<8x8xf32> -> vector<8x8xf32>
    %c3 = arith.constant 3 : index
    %c0_36 = arith.constant 0 : index
    %c0_37 = arith.constant 0 : index
    %92 = vector.load %arg3[%c3, %c0_36, %c0_37] : memref<4x8x32xf32, #tpu.memory_space<vmem>>, vector<1x8x32xf32>
    %93 = vector.shape_cast %92 : vector<1x8x32xf32> to vector<8x32xf32>
    %cst_38 = arith.constant dense<0.000000e+00> : vector<8x32xf32>
    %94 = tpu.matmul %91, %93, %cst_38 {dimension_numbers = #tpu.dot_dimension_numbers<[1], [0], [0], [1], [0, 0, 1, 1], [], []>} : vector<8x8xf32>, vector<8x32xf32>, vector<8x32xf32> -> vector<8x32xf32>
    %95 = arith.addf %73, %94 : vector<8x32xf32>
    %96 = vector.broadcast %6 : vector<1x32xf32> to vector<8x32xf32>
    %97 = arith.addf %95, %96 : vector<8x32xf32>
    %c0_39 = arith.constant 0 : index
    %c0_40 = arith.constant 0 : index
    %98 = vector.load %arg5[%c0_39, %c0_40] : memref<16x32xf32, #tpu.memory_space<vmem>>, vector<8x32xf32>
    tpu.vector_store %arg5[%c0_39, %c0_40], %97 {strides = array<i32>} : memref<16x32xf32, #tpu.memory_space<vmem>>, vector<8x32xf32>,
    %cst_41 = arith.constant 0.000000e+00 : f32
    %99 = vector.broadcast %cst_41 : f32 to vector<8x32xf32>
    %100 = vector.extract_strided_slice %2 {offsets = [8, 0], sizes = [8, 8], strides = [1, 1]} : vector<16x96xf32> to vector<8x8xf32>
    %101 = vector.extract_strided_slice %2 {offsets = [8, 32], sizes = [8, 8], strides = [1, 1]} : vector<16x96xf32> to vector<8x8xf32>
    %102 = vector.extract_strided_slice %2 {offsets = [8, 64], sizes = [8, 8], strides = [1, 1]} : vector<16x96xf32> to vector<8x8xf32>
    %103 = tpu.transpose %100, [1, 0] : vector<8x8xf32> -> vector<8x8xf32>
    %cst_42 = arith.constant dense<0.000000e+00> : vector<8x8xf32>
    %104 = tpu.matmul %101, %103, %cst_42 {dimension_numbers = #tpu.dot_dimension_numbers<[1], [0], [0], [1], [0, 0, 1, 1], [], []>} : vector<8x8xf32>, vector<8x8xf32>, vector<8x8xf32> -> vector<8x8xf32>
    %cst_43 = arith.constant -1.000000e+30 : f32
    %105 = vector.broadcast %cst_43 : f32 to vector<8x8xf32>
    %106 = arith.select %5, %104, %105 : vector<8x8xi1>, vector<8x8xf32>
    %cst_44 = arith.constant dense<0xFF800000> : vector<8xf32>
    %107 = vector.multi_reduction <maximumf>, %106, %cst_44 [1] : vector<8x8xf32> to vector<8xf32>
    %108 = vector.shape_cast %107 : vector<8xf32> to vector<8x1xf32>
    %109 = vector.broadcast %108 : vector<8x1xf32> to vector<8x8xf32>
    %110 = arith.subf %106, %109 : vector<8x8xf32>
    %111 = math.exp %110 : vector<8x8xf32>
    %cst_45 = arith.constant dense<0.000000e+00> : vector<8xf32>
    %112 = vector.multi_reduction <add>, %111, %cst_45 [1] : vector<8x8xf32> to vector<8xf32>
    %113 = vector.shape_cast %112 : vector<8xf32> to vector<8x1xf32>
    %114 = tpu.reciprocal %113 {approx = true} : vector<8x1xf32> -> vector<8x1xf32>
    %115 = vector.broadcast %114 : vector<8x1xf32> to vector<8x8xf32>
    %116 = arith.mulf %111, %115 : vector<8x8xf32>
    %cst_46 = arith.constant dense<0.000000e+00> : vector<8x8xf32>
    %117 = tpu.matmul %116, %102, %cst_46 {dimension_numbers = #tpu.dot_dimension_numbers<[1], [0], [0], [1], [0, 0, 1, 1], [], []>} : vector<8x8xf32>, vector<8x8xf32>, vector<8x8xf32> -> vector<8x8xf32>
    %c0_47 = arith.constant 0 : index
    %c0_48 = arith.constant 0 : index
    %c0_49 = arith.constant 0 : index
    %118 = vector.load %arg3[%c0_47, %c0_48, %c0_49] : memref<4x8x32xf32, #tpu.memory_space<vmem>>, vector<1x8x32xf32>
    %119 = vector.shape_cast %118 : vector<1x8x32xf32> to vector<8x32xf32>
    %cst_50 = arith.constant dense<0.000000e+00> : vector<8x32xf32>
    %120 = tpu.matmul %117, %119, %cst_50 {dimension_numbers = #tpu.dot_dimension_numbers<[1], [0], [0], [1], [0, 0, 1, 1], [], []>} : vector<8x8xf32>, vector<8x32xf32>, vector<8x32xf32> -> vector<8x32xf32>
    %121 = arith.addf %99, %120 : vector<8x32xf32>
    %122 = vector.extract_strided_slice %2 {offsets = [8, 8], sizes = [8, 8], strides = [1, 1]} : vector<16x96xf32> to vector<8x8xf32>
    %123 = vector.extract_strided_slice %2 {offsets = [8, 40], sizes = [8, 8], strides = [1, 1]} : vector<16x96xf32> to vector<8x8xf32>
    %124 = vector.extract_strided_slice %2 {offsets = [8, 72], sizes = [8, 8], strides = [1, 1]} : vector<16x96xf32> to vector<8x8xf32>
    %125 = tpu.transpose %122, [1, 0] : vector<8x8xf32> -> vector<8x8xf32>
    %cst_51 = arith.constant dense<0.000000e+00> : vector<8x8xf32>
    %126 = tpu.matmul %123, %125, %cst_51 {dimension_numbers = #tpu.dot_dimension_numbers<[1], [0], [0], [1], [0, 0, 1, 1], [], []>} : vector<8x8xf32>, vector<8x8xf32>, vector<8x8xf32> -> vector<8x8xf32>
    %cst_52 = arith.constant -1.000000e+30 : f32
    %127 = vector.broadcast %cst_52 : f32 to vector<8x8xf32>
    %128 = arith.select %5, %126, %127 : vector<8x8xi1>, vector<8x8xf32>
    %cst_53 = arith.constant dense<0xFF800000> : vector<8xf32>
    %129 = vector.multi_reduction <maximumf>, %128, %cst_53 [1] : vector<8x8xf32> to vector<8xf32>
    %130 = vector.shape_cast %129 : vector<8xf32> to vector<8x1xf32>
    %131 = vector.broadcast %130 : vector<8x1xf32> to vector<8x8xf32>
    %132 = arith.subf %128, %131 : vector<8x8xf32>
    %133 = math.exp %132 : vector<8x8xf32>
    %cst_54 = arith.constant dense<0.000000e+00> : vector<8xf32>
    %134 = vector.multi_reduction <add>, %133, %cst_54 [1] : vector<8x8xf32> to vector<8xf32>
    %135 = vector.shape_cast %134 : vector<8xf32> to vector<8x1xf32>
    %136 = tpu.reciprocal %135 {approx = true} : vector<8x1xf32> -> vector<8x1xf32>
    %137 = vector.broadcast %136 : vector<8x1xf32> to vector<8x8xf32>
    %138 = arith.mulf %133, %137 : vector<8x8xf32>
    %cst_55 = arith.constant dense<0.000000e+00> : vector<8x8xf32>
    %139 = tpu.matmul %138, %124, %cst_55 {dimension_numbers = #tpu.dot_dimension_numbers<[1], [0], [0], [1], [0, 0, 1, 1], [], []>} : vector<8x8xf32>, vector<8x8xf32>, vector<8x8xf32> -> vector<8x8xf32>
    %c1_56 = arith.constant 1 : index
    %c0_57 = arith.constant 0 : index
    %c0_58 = arith.constant 0 : index
    %140 = vector.load %arg3[%c1_56, %c0_57, %c0_58] : memref<4x8x32xf32, #tpu.memory_space<vmem>>, vector<1x8x32xf32>
    %141 = vector.shape_cast %140 : vector<1x8x32xf32> to vector<8x32xf32>
    %cst_59 = arith.constant dense<0.000000e+00> : vector<8x32xf32>
    %142 = tpu.matmul %139, %141, %cst_59 {dimension_numbers = #tpu.dot_dimension_numbers<[1], [0], [0], [1], [0, 0, 1, 1], [], []>} : vector<8x8xf32>, vector<8x32xf32>, vector<8x32xf32> -> vector<8x32xf32>
    %143 = arith.addf %121, %142 : vector<8x32xf32>
    %144 = vector.extract_strided_slice %2 {offsets = [8, 16], sizes = [8, 8], strides = [1, 1]} : vector<16x96xf32> to vector<8x8xf32>
    %145 = vector.extract_strided_slice %2 {offsets = [8, 48], sizes = [8, 8], strides = [1, 1]} : vector<16x96xf32> to vector<8x8xf32>
    %146 = vector.extract_strided_slice %2 {offsets = [8, 80], sizes = [8, 8], strides = [1, 1]} : vector<16x96xf32> to vector<8x8xf32>
    %147 = tpu.transpose %144, [1, 0] : vector<8x8xf32> -> vector<8x8xf32>
    %cst_60 = arith.constant dense<0.000000e+00> : vector<8x8xf32>
    %148 = tpu.matmul %145, %147, %cst_60 {dimension_numbers = #tpu.dot_dimension_numbers<[1], [0], [0], [1], [0, 0, 1, 1], [], []>} : vector<8x8xf32>, vector<8x8xf32>, vector<8x8xf32> -> vector<8x8xf32>
    %cst_61 = arith.constant -1.000000e+30 : f32
    %149 = vector.broadcast %cst_61 : f32 to vector<8x8xf32>
    %150 = arith.select %5, %148, %149 : vector<8x8xi1>, vector<8x8xf32>
    %cst_62 = arith.constant dense<0xFF800000> : vector<8xf32>
    %151 = vector.multi_reduction <maximumf>, %150, %cst_62 [1] : vector<8x8xf32> to vector<8xf32>
    %152 = vector.shape_cast %151 : vector<8xf32> to vector<8x1xf32>
    %153 = vector.broadcast %152 : vector<8x1xf32> to vector<8x8xf32>
    %154 = arith.subf %150, %153 : vector<8x8xf32>
    %155 = math.exp %154 : vector<8x8xf32>
    %cst_63 = arith.constant dense<0.000000e+00> : vector<8xf32>
    %156 = vector.multi_reduction <add>, %155, %cst_63 [1] : vector<8x8xf32> to vector<8xf32>
    %157 = vector.shape_cast %156 : vector<8xf32> to vector<8x1xf32>
    %158 = tpu.reciprocal %157 {approx = true} : vector<8x1xf32> -> vector<8x1xf32>
    %159 = vector.broadcast %158 : vector<8x1xf32> to vector<8x8xf32>
    %160 = arith.mulf %155, %159 : vector<8x8xf32>
    %cst_64 = arith.constant dense<0.000000e+00> : vector<8x8xf32>
    %161 = tpu.matmul %160, %146, %cst_64 {dimension_numbers = #tpu.dot_dimension_numbers<[1], [0], [0], [1], [0, 0, 1, 1], [], []>} : vector<8x8xf32>, vector<8x8xf32>, vector<8x8xf32> -> vector<8x8xf32>
    %c2_65 = arith.constant 2 : index
    %c0_66 = arith.constant 0 : index
    %c0_67 = arith.constant 0 : index
    %162 = vector.load %arg3[%c2_65, %c0_66, %c0_67] : memref<4x8x32xf32, #tpu.memory_space<vmem>>, vector<1x8x32xf32>
    %163 = vector.shape_cast %162 : vector<1x8x32xf32> to vector<8x32xf32>
    %cst_68 = arith.constant dense<0.000000e+00> : vector<8x32xf32>
    %164 = tpu.matmul %161, %163, %cst_68 {dimension_numbers = #tpu.dot_dimension_numbers<[1], [0], [0], [1], [0, 0, 1, 1], [], []>} : vector<8x8xf32>, vector<8x32xf32>, vector<8x32xf32> -> vector<8x32xf32>
    %165 = arith.addf %143, %164 : vector<8x32xf32>
    %166 = vector.extract_strided_slice %2 {offsets = [8, 24], sizes = [8, 8], strides = [1, 1]} : vector<16x96xf32> to vector<8x8xf32>
    %167 = vector.extract_strided_slice %2 {offsets = [8, 56], sizes = [8, 8], strides = [1, 1]} : vector<16x96xf32> to vector<8x8xf32>
    %168 = vector.extract_strided_slice %2 {offsets = [8, 88], sizes = [8, 8], strides = [1, 1]} : vector<16x96xf32> to vector<8x8xf32>
    %169 = tpu.transpose %166, [1, 0] : vector<8x8xf32> -> vector<8x8xf32>
    %cst_69 = arith.constant dense<0.000000e+00> : vector<8x8xf32>
    %170 = tpu.matmul %167, %169, %cst_69 {dimension_numbers = #tpu.dot_dimension_numbers<[1], [0], [0], [1], [0, 0, 1, 1], [], []>} : vector<8x8xf32>, vector<8x8xf32>, vector<8x8xf32> -> vector<8x8xf32>
    %cst_70 = arith.constant -1.000000e+30 : f32
    %171 = vector.broadcast %cst_70 : f32 to vector<8x8xf32>
    %172 = arith.select %5, %170, %171 : vector<8x8xi1>, vector<8x8xf32>
    %cst_71 = arith.constant dense<0xFF800000> : vector<8xf32>
    %173 = vector.multi_reduction <maximumf>, %172, %cst_71 [1] : vector<8x8xf32> to vector<8xf32>
    %174 = vector.shape_cast %173 : vector<8xf32> to vector<8x1xf32>
    %175 = vector.broadcast %174 : vector<8x1xf32> to vector<8x8xf32>
    %176 = arith.subf %172, %175 : vector<8x8xf32>
    %177 = math.exp %176 : vector<8x8xf32>
    %cst_72 = arith.constant dense<0.000000e+00> : vector<8xf32>
    %178 = vector.multi_reduction <add>, %177, %cst_72 [1] : vector<8x8xf32> to vector<8xf32>
    %179 = vector.shape_cast %178 : vector<8xf32> to vector<8x1xf32>
    %180 = tpu.reciprocal %179 {approx = true} : vector<8x1xf32> -> vector<8x1xf32>
    %181 = vector.broadcast %180 : vector<8x1xf32> to vector<8x8xf32>
    %182 = arith.mulf %177, %181 : vector<8x8xf32>
    %cst_73 = arith.constant dense<0.000000e+00> : vector<8x8xf32>
    %183 = tpu.matmul %182, %168, %cst_73 {dimension_numbers = #tpu.dot_dimension_numbers<[1], [0], [0], [1], [0, 0, 1, 1], [], []>} : vector<8x8xf32>, vector<8x8xf32>, vector<8x8xf32> -> vector<8x8xf32>
    %c3_74 = arith.constant 3 : index
    %c0_75 = arith.constant 0 : index
    %c0_76 = arith.constant 0 : index
    %184 = vector.load %arg3[%c3_74, %c0_75, %c0_76] : memref<4x8x32xf32, #tpu.memory_space<vmem>>, vector<1x8x32xf32>
    %185 = vector.shape_cast %184 : vector<1x8x32xf32> to vector<8x32xf32>
    %cst_77 = arith.constant dense<0.000000e+00> : vector<8x32xf32>
    %186 = tpu.matmul %183, %185, %cst_77 {dimension_numbers = #tpu.dot_dimension_numbers<[1], [0], [0], [1], [0, 0, 1, 1], [], []>} : vector<8x8xf32>, vector<8x32xf32>, vector<8x32xf32> -> vector<8x32xf32>
    %187 = arith.addf %165, %186 : vector<8x32xf32>
    %188 = vector.broadcast %6 : vector<1x32xf32> to vector<8x32xf32>
    %189 = arith.addf %187, %188 : vector<8x32xf32>
    %c8 = arith.constant 8 : index
    %c0_78 = arith.constant 0 : index
    %190 = vector.load %arg5[%c8, %c0_78] : memref<16x32xf32, #tpu.memory_space<vmem>>, vector<8x32xf32>
    tpu.vector_store %arg5[%c8, %c0_78], %189 {strides = array<i32>} : memref<16x32xf32, #tpu.memory_space<vmem>>, vector<8x32xf32>,
    return
  }
  func.func @transform_0(%arg0: i32) -> (i32, i32) {
    %c0_i32 = arith.constant 0 : i32
    %c0_i32_0 = arith.constant 0 : i32
    return %arg0, %c0_i32 : i32, i32
  }
  func.func @transform_1(%arg0: i32) -> (i32, i32) {
    %c0_i32 = arith.constant 0 : i32
    %c0_i32_0 = arith.constant 0 : i32
    %c0_i32_1 = arith.constant 0 : i32
    return %c0_i32, %c0_i32_0 : i32, i32
  }
  func.func @transform_2(%arg0: i32) -> (i32, i32, i32) {
    %c0_i32 = arith.constant 0 : i32
    %c0_i32_0 = arith.constant 0 : i32
    %c0_i32_1 = arith.constant 0 : i32
    %c0_i32_2 = arith.constant 0 : i32
    return %c0_i32, %c0_i32_0, %c0_i32_1 : i32, i32, i32
  }
  func.func @transform_3(%arg0: i32) -> (i32, i32) {
    %c0_i32 = arith.constant 0 : i32
    %c0_i32_0 = arith.constant 0 : i32
    %c0_i32_1 = arith.constant 0 : i32
    return %c0_i32, %c0_i32_0 : i32, i32
  }
  func.func @transform_4(%arg0: i32) -> (i32, i32) {
    %c0_i32 = arith.constant 0 : i32
    %c0_i32_0 = arith.constant 0 : i32
    return %arg0, %c0_i32 : i32, i32
  }
}

</mosaic_0001>

<llo_original>
// kernel: tpu_custom_call.1
$region0: #{tpu_custom_call.1}
  #allocation0 [shape = 'u32[]', space=smem, size = 0x4, offset = 0x4, fixed_abs, tag = 'smem constant byte address 0x4 - core index']
  #allocation1 [shape = 'u32[144,128]{1,0:T(1,128)}', space=vmem, size = 0x12000, scoped, tag = 'internal scratch']
  %s0 = inlined_call_operand.hbm [shape: f32[16,32], index: 0, kind: input, shape index: {}]
  %s1 = inlined_call_operand.hbm [shape: f32[32,96], index: 1, kind: input, shape index: {}]
  %s2 = inlined_call_operand.hbm [shape: f32[4,8,32], index: 2, kind: input, shape index: {}]
  %s3 = inlined_call_operand.vmem [shape: f32[1,32], index: 3, kind: input, shape index: {}]
  %s4 = inlined_call_operand.hbm [shape: f32[16,32], index: 4, kind: output, shape index: {}]
  %s5 = sld [smem:[#allocation0]]
  $region38: #{tpu_custom_call.1} parent=0
    _
  %s7 = ssub.s32 1, %s5
  %s8 = scalar_select 0, %s7, %s5
  $region1: #{tpu_custom_call.1} parent=0
    #allocation2 [shape = 'u8[8192]{0}', space=vmem, size = 0x2000, scoped, tag = 'input window, operand 0, single buffered']
    #allocation3 [shape = 's32[1]{0}', space=sflag, size = 0x4, scoped, tag = 'scoped memory for tpu_custom_call.1']
    #allocation4 [shape = 's32[1]{0}', space=sflag, size = 0x4, scoped, tag = 'scoped memory for tpu_custom_call.1']
    #allocation5 [shape = 'u8[16384]{0}', space=vmem, size = 0x4000, scoped, tag = 'input window, operand 1, single buffered']
    #allocation6 [shape = 's32[1]{0}', space=sflag, size = 0x4, scoped, tag = 'scoped memory for tpu_custom_call.1']
    #allocation7 [shape = 'u8[16384]{0}', space=vmem, size = 0x4000, scoped, tag = 'input window, operand 2, single buffered']
    #allocation8 [shape = 'u8[8192]{0}', space=vmem, size = 0x2000, scoped, tag = 'output window, operand 0, single buffered']
    %9 = vsyncpa [#allocation3], 0
    %10 = vsyncpa [#allocation6], 0
    %11 = vsyncpa [#allocation4], 0
    // Predicated region
    $region2: #{tpu_custom_call.1} parent=1 // pred_check
      _
    $region3: #{tpu_custom_call.1} parent=1 // pred_check_branch
      %13 = sbr.rel (0) target = $region5
    $region4: #{tpu_custom_call.1} parent=1 // pred_region
      %s15 = ssub.s32 256, 256
      %16 = vsyncadd [#allocation3], %s15
      %s17 = sshll.u32 [#allocation2], 4
      %s18 = int_to_ptr.vmem [resolvable:$true] %s17
      %23 = dma.hbm_to_vmem [thread:$0]  %s0, 256, %s18, [#allocation3], 128, 128, 8
    $region5: #{tpu_custom_call.1} parent=1 // pred_fallthru
      _
    // Predicated region
    $region6: #{tpu_custom_call.1} parent=1 // pred_check
      _
    $region7: #{tpu_custom_call.1} parent=1 // pred_check_branch
      %25 = sbr.rel (0) target = $region9
    $region8: #{tpu_custom_call.1} parent=1 // pred_region
      %s27 = ssub.s32 512, 512
      %28 = vsyncadd [#allocation6], %s27
      %s29 = sshll.u32 [#allocation5], 4
      %s30 = int_to_ptr.vmem [resolvable:$true] %s29
      %35 = dma.hbm_to_vmem [thread:$0]  %s1, 512, %s30, [#allocation6], 128, 128, 8
    $region9: #{tpu_custom_call.1} parent=1 // pred_fallthru
      _
    // Predicated region
    $region10: #{tpu_custom_call.1} parent=1 // pred_check
      _
    $region11: #{tpu_custom_call.1} parent=1 // pred_check_branch
      %37 = sbr.rel (0) target = $region13
    $region12: #{tpu_custom_call.1} parent=1 // pred_region
      %s39 = ssub.s32 512, 512
      %40 = vsyncadd [#allocation6], %s39
      %s41 = sshll.u32 [#allocation7], 4
      %s42 = int_to_ptr.vmem [resolvable:$true] %s41
      %47 = dma.hbm_to_vmem [thread:$0]  %s2, 512, %s42, [#allocation6], 128, 128, 8
    $region13: #{tpu_custom_call.1} parent=1 // pred_fallthru
      _
    // Predicated region
    $region14: #{tpu_custom_call.1} parent=1 // pred_check
      _
    $region15: #{tpu_custom_call.1} parent=1 // pred_check_branch
      %49 = sbr.rel (0) target = $region17
    $region16: #{tpu_custom_call.1} parent=1 // pred_region
      _
    $region17: #{tpu_custom_call.1} parent=1 // pred_fallthru
      _
    // Predicated region
    $region18: #{tpu_custom_call.1} parent=1 // pred_check
      _
    $region19: #{tpu_custom_call.1} parent=1 // pred_check_branch
      %51 = sbr.rel (0) target = $region21
    $region20: #{tpu_custom_call.1} parent=1 // pred_region
      %52 = dma.done [#allocation3], 256
    $region21: #{tpu_custom_call.1} parent=1 // pred_fallthru
      _
    // Predicated region
    $region22: #{tpu_custom_call.1} parent=1 // pred_check
      _
    $region23: #{tpu_custom_call.1} parent=1 // pred_check_branch
      %54 = sbr.rel (0) target = $region25
    $region24: #{tpu_custom_call.1} parent=1 // pred_region
      %55 = dma.done [#allocation6], 512
    $region25: #{tpu_custom_call.1} parent=1 // pred_fallthru
      _
    // Predicated region
    $region26: #{tpu_custom_call.1} parent=1 // pred_check
      _
    $region27: #{tpu_custom_call.1} parent=1 // pred_check_branch
      %57 = sbr.rel (0) target = $region29
    $region28: #{tpu_custom_call.1} parent=1 // pred_region
      %58 = dma.done [#allocation6], 512
    $region29: #{tpu_custom_call.1} parent=1 // pred_fallthru
      _
    %v59 = vld [vmem:[#allocation2] sm:$0xff]
    %v60 = vld [vmem:[#allocation2 + $0x8] sm:$0xff]
    %v61 = vld [vmem:[#allocation5] sm:$0xff]
    %v62 = vld [vmem:[#allocation5 + $0x8] sm:$0xff]
    %v63 = vld [vmem:[#allocation5 + $0x10] sm:$0xff]
    %v64 = vld [vmem:[#allocation5 + $0x18] sm:$0xff]
    %vm65 = vcmask 261120
    %v67 = vsel %vm65, %v59, 0
    %v70 = vsel %vm65, %v60, 0
    %72 = vmatprep.subr.mxu0 0.0
    %73 = vmatpush1.msra.mxu0 %v61
    %74 = vmatprep.subr.mxu0 0.0
    %75 = vmatpush1.msra.mxu0 %v62
    %76 = vmatprep.subr.mxu0 0.0
    %77 = vmatpush1.msra.mxu0 %v63
    %78 = vmatprep.subr.mxu0 0.0
    %79 = vmatpush1.msra.mxu0 %v64
    %80 = vmatprep.subr.mxu0 0.0
    %81 = vmatpush1.msra.mxu0 0.0
    %82 = vmatprep.subr.mxu0 0.0
    %83 = vmatpush1.msra.mxu0 0.0
    %84 = vmatprep.subr.mxu0 0.0
    %85 = vmatpush1.msra.mxu0 0.0
    %86 = vmatprep.subr.mxu0 0.0
    %87 = vmatpush1.msra.mxu0 0.0
    %88 = vmatprep.subr.mxu0 0.0
    %89 = vmatpush1.msra.mxu0 0.0
    %90 = vmatprep.subr.mxu0 0.0
    %91 = vmatpush1.msra.mxu0 0.0
    %92 = vmatprep.subr.mxu0 0.0
    %93 = vmatpush1.msra.mxu0 0.0
    %94 = vmatprep.subr.mxu0 0.0
    %95 = vmatpush1.msra.mxu0 0.0
    %96 = vmatprep.subr.mxu0 0.0
    %97 = vmatpush1.msra.mxu0 0.0
    %98 = vmatprep.subr.mxu0 0.0
    %99 = vmatpush1.msra.mxu0 0.0
    %100 = vmatprep.subr.mxu0 0.0
    %101 = vmatpush1.msra.mxu0 0.0
    %102 = vmatprep.subr.mxu0 0.0
    %103 = vmatpush1.msra.mxu0 0.0
    %104 = vmatprep.subr.mxu0 0.0
    %105 = vmatpush1.msra.mxu0 0.0
    %106 = vmatprep.subr.mxu0 0.0
    %107 = vmatpush1.msra.mxu0 0.0
    %108 = vmatprep.subr.mxu0 0.0
    %109 = vmatpush1.msra.mxu0 0.0
    %110 = vmatprep.subr.mxu0 0.0
    %111 = vmatpush1.msra.mxu0 0.0
    %112 = vmatprep.subr.mxu0 0.0
    %113 = vmatpush1.msra.mxu0 0.0
    %114 = vmatprep.subr.mxu0 0.0
    %115 = vmatpush1.msra.mxu0 0.0
    %116 = vmatprep.subr.mxu0 0.0
    %117 = vmatpush1.msra.mxu0 0.0
    %118 = vmatprep.subr.mxu0 0.0
    %119 = vmatpush1.msra.mxu0 0.0
    %120 = vmatprep.subr.mxu0 0.0
    %121 = vmatpush1.msra.mxu0 0.0
    %122 = vmatprep.subr.mxu0 0.0
    %123 = vmatpush1.msra.mxu0 0.0
    %124 = vmatprep.subr.mxu0 0.0
    %125 = vmatpush1.msra.mxu0 0.0
    %126 = vmatprep.subr.mxu0 0.0
    %127 = vmatpush1.msra.mxu0 0.0
    %128 = vmatprep.subr.mxu0 0.0
    %129 = vmatpush1.msra.mxu0 0.0
    %130 = vmatprep.subr.mxu0 0.0
    %131 = vmatpush1.msra.mxu0 0.0
    %132 = vmatprep.subr.mxu0 0.0
    %133 = vmatpush1.msra.mxu0 0.0
    %134 = vmatprep.subr.mxu0 0.0
    %135 = vmatpush1.msra.mxu0 0.0
    %136 = vmatprep.mubr.f32.mxu0 0.0
    %137 = vmatmul.mubr.f32.gmra.mrb[0].mxu0 %v67
    %v138 = vpop.f32.mrb[0].mxu0
    %v139 = vadd.f32 0.0, %v138
    %v140 = vpop.f32.mrb[0].mxu0
    %141 = vmatprep.mubr.f32.mxu0 0.0
    %142 = vmatmul.mubr.f32.gmra.mrb[0].mxu0 %v70
    %v143 = vpop.f32.mrb[0].mxu0
    %v144 = vadd.f32 0.0, %v143
    %v145 = vpop.f32.mrb[0].mxu0
    %146 = vdwg.mxu0
    %v147 = vlaneseq
    %v148 = vshrl.u32 %v147, 7
    %v149 = vlaneseq
    %v150 = vand.u32 %v149, 127
    %vm151 = vcmp.ge.s32.totalorder %v148, %v150
    %v152 = vld [vmem:[%s3] sm:$0x1]
    %154 = vrot.lane.b32.xlu0 %v139, 96
    %v155 = vpop.permute.xlu0 %154
    %vm156 = vcmask 64512
    %v157 = vsel %vm156, %v155, 0
    %v159 = vsel %vm156, %v139, 0
    %161 = vmatprep.subr.mxu0 0.0
    %162 = vmatpush1.xpose.msra.mxu0 %v159
    %163 = vmatprep.subr.mxu0 0.0
    %164 = vmatpush1.xpose.msra.mxu0 0.0
    %165 = vmatprep.subr.mxu0 0.0
    %166 = vmatpush1.xpose.msra.mxu0 0.0
    %167 = vmatprep.subr.mxu0 0.0
    %168 = vmatpush1.xpose.msra.mxu0 0.0
    %169 = vmatprep.subr.mxu0 0.0
    %170 = vmatpush1.xpose.msra.mxu0 0.0
    %171 = vmatprep.subr.mxu0 0.0
    %172 = vmatpush1.xpose.msra.mxu0 0.0
    %173 = vmatprep.subr.mxu0 0.0
    %174 = vmatpush1.xpose.msra.mxu0 0.0
    %175 = vmatprep.subr.mxu0 0.0
    %176 = vmatpush1.xpose.msra.mxu0 0.0
    %177 = vmatprep.subr.mxu0 0.0
    %178 = vmatpush1.xpose.msra.mxu0 0.0
    %179 = vmatprep.subr.mxu0 0.0
    %180 = vmatpush1.xpose.msra.mxu0 0.0
    %181 = vmatprep.subr.mxu0 0.0
    %182 = vmatpush1.xpose.msra.mxu0 0.0
    %183 = vmatprep.subr.mxu0 0.0
    %184 = vmatpush1.xpose.msra.mxu0 0.0
    %185 = vmatprep.subr.mxu0 0.0
    %186 = vmatpush1.xpose.msra.mxu0 0.0
    %187 = vmatprep.subr.mxu0 0.0
    %188 = vmatpush1.xpose.msra.mxu0 0.0
    %189 = vmatprep.subr.mxu0 0.0
    %190 = vmatpush1.xpose.msra.mxu0 0.0
    %191 = vmatprep.subr.mxu0 0.0
    %192 = vmatpush1.xpose.msra.mxu0 0.0
    %193 = vmatprep.subr.mxu0 0.0
    %194 = vmatpush1.xpose.msra.mxu0 0.0
    %195 = vmatprep.subr.mxu0 0.0
    %196 = vmatpush1.xpose.msra.mxu0 0.0
    %197 = vmatprep.subr.mxu0 0.0
    %198 = vmatpush1.xpose.msra.mxu0 0.0
    %199 = vmatprep.subr.mxu0 0.0
    %200 = vmatpush1.xpose.msra.mxu0 0.0
    %201 = vmatprep.subr.mxu0 0.0
    %202 = vmatpush1.xpose.msra.mxu0 0.0
    %203 = vmatprep.subr.mxu0 0.0
    %204 = vmatpush1.xpose.msra.mxu0 0.0
    %205 = vmatprep.subr.mxu0 0.0
    %206 = vmatpush1.xpose.msra.mxu0 0.0
    %207 = vmatprep.subr.mxu0 0.0
    %208 = vmatpush1.xpose.msra.mxu0 0.0
    %209 = vmatprep.subr.mxu0 0.0
    %210 = vmatpush1.xpose.msra.mxu0 0.0
    %211 = vmatprep.subr.mxu0 0.0
    %212 = vmatpush1.xpose.msra.mxu0 0.0
    %213 = vmatprep.subr.mxu0 0.0
    %214 = vmatpush1.xpose.msra.mxu0 0.0
    %215 = vmatprep.subr.mxu0 0.0
    %216 = vmatpush1.xpose.msra.mxu0 0.0
    %217 = vmatprep.subr.mxu0 0.0
    %218 = vmatpush1.xpose.msra.mxu0 0.0
    %219 = vmatprep.subr.mxu0 0.0
    %220 = vmatpush1.xpose.msra.mxu0 0.0
    %221 = vmatprep.subr.mxu0 0.0
    %222 = vmatpush1.xpose.msra.mxu0 0.0
    %223 = vmatprep.subr.mxu0 0.0
    %224 = vmatpush1.xpose.msra.mxu0 0.0
    %225 = vmatprep.mubr.f32.mxu0 0.0
    %226 = vmatmul.mubr.f32.gmra.mrb[0].mxu0 %v157
    %v227 = vpop.f32.mrb[0].mxu0
    %v228 = vadd.f32 0.0, %v227
    %v229 = vpop.f32.mrb[0].mxu0
    %230 = vdwg.mxu0
    %v231 = vsel %vm151, %v228, -1e+30
    %v232 = vsel %vm156, %v231, -inf
    %233 = vmax.xlane.f32.xlu0 %v232
    %v234 = vpop.xlane.xlu0 %233
    %v235 = vsub.f32 %v231, %v234
    %v236 = vmul.f32 %v235, 1.442695
    %v237 = vpow.pop %v236
    %v238 = vsel %vm156, %v237, 0.0
    %239 = vadd.xlane.f32.xlu0 %v238
    %v240 = vpop.xlane.xlu0 %239
    %v241 = vrcp.pop %v240
    %v242 = vmul.f32 %v237, %v241
    %243 = vrot.lane.b32.xlu0 %v139, 64
    %v244 = vpop.permute.xlu0 %243
    %v247 = vsel %vm156, %v242, 0
    %249 = vmatprep.subr.mxu0 0.0
    %250 = vmatpush1.msra.mxu0 %v244
    %251 = vmatprep.subr.mxu0 0.0
    %252 = vmatpush1.msra.mxu0 0.0
    %253 = vmatprep.subr.mxu0 0.0
    %254 = vmatpush1.msra.mxu0 0.0
    %255 = vmatprep.subr.mxu0 0.0
    %256 = vmatpush1.msra.mxu0 0.0
    %257 = vmatprep.subr.mxu0 0.0
    %258 = vmatpush1.msra.mxu0 0.0
    %259 = vmatprep.subr.mxu0 0.0
    %260 = vmatpush1.msra.mxu0 0.0
    %261 = vmatprep.subr.mxu0 0.0
    %262 = vmatpush1.msra.mxu0 0.0
    %263 = vmatprep.subr.mxu0 0.0
    %264 = vmatpush1.msra.mxu0 0.0
    %265 = vmatprep.subr.mxu0 0.0
    %266 = vmatpush1.msra.mxu0 0.0
    %267 = vmatprep.subr.mxu0 0.0
    %268 = vmatpush1.msra.mxu0 0.0
    %269 = vmatprep.subr.mxu0 0.0
    %270 = vmatpush1.msra.mxu0 0.0
    %271 = vmatprep.subr.mxu0 0.0
    %272 = vmatpush1.msra.mxu0 0.0
    %273 = vmatprep.subr.mxu0 0.0
    %274 = vmatpush1.msra.mxu0 0.0
    %275 = vmatprep.subr.mxu0 0.0
    %276 = vmatpush1.msra.mxu0 0.0
    %277 = vmatprep.subr.mxu0 0.0
    %278 = vmatpush1.msra.mxu0 0.0
    %279 = vmatprep.subr.mxu0 0.0
    %280 = vmatpush1.msra.mxu0 0.0
    %281 = vmatprep.subr.mxu0 0.0
    %282 = vmatpush1.msra.mxu0 0.0
    %283 = vmatprep.subr.mxu0 0.0
    %284 = vmatpush1.msra.mxu0 0.0
    %285 = vmatprep.subr.mxu0 0.0
    %286 = vmatpush1.msra.mxu0 0.0
    %287 = vmatprep.subr.mxu0 0.0
    %288 = vmatpush1.msra.mxu0 0.0
    %289 = vmatprep.subr.mxu0 0.0
    %290 = vmatpush1.msra.mxu0 0.0
    %291 = vmatprep.subr.mxu0 0.0
    %292 = vmatpush1.msra.mxu0 0.0
    %293 = vmatprep.subr.mxu0 0.0
    %294 = vmatpush1.msra.mxu0 0.0
    %295 = vmatprep.subr.mxu0 0.0
    %296 = vmatpush1.msra.mxu0 0.0
    %297 = vmatprep.subr.mxu0 0.0
    %298 = vmatpush1.msra.mxu0 0.0
    %299 = vmatprep.subr.mxu0 0.0
    %300 = vmatpush1.msra.mxu0 0.0
    %301 = vmatprep.subr.mxu0 0.0
    %302 = vmatpush1.msra.mxu0 0.0
    %303 = vmatprep.subr.mxu0 0.0
    %304 = vmatpush1.msra.mxu0 0.0
    %305 = vmatprep.subr.mxu0 0.0
    %306 = vmatpush1.msra.mxu0 0.0
    %307 = vmatprep.subr.mxu0 0.0
    %308 = vmatpush1.msra.mxu0 0.0
    %309 = vmatprep.subr.mxu0 0.0
    %310 = vmatpush1.msra.mxu0 0.0
    %311 = vmatprep.subr.mxu0 0.0
    %312 = vmatpush1.msra.mxu0 0.0
    %313 = vmatprep.mubr.f32.mxu0 0.0
    %314 = vmatmul.mubr.f32.gmra.mrb[0].mxu0 %v247
    %v315 = vpop.f32.mrb[0].mxu0
    %v316 = vadd.f32 0.0, %v315
    %v317 = vpop.f32.mrb[0].mxu0
    %318 = vdwg.mxu0
    %v319 = vld [vmem:[#allocation7] sm:$0xff]
    %320 = vrot.lane.b32.xlu0 %v139, 88
    %v321 = vpop.permute.xlu0 %320
    %322 = vrot.lane.b32.xlu0 %v139, 120
    %v323 = vpop.permute.xlu0 %322
    %v324 = vsel %vm156, %v321, 0
    %v326 = vsel %vm156, %v323, 0
    %328 = vmatprep.subr.mxu0 0.0
    %329 = vmatpush1.xpose.msra.mxu0 %v326
    %330 = vmatprep.subr.mxu0 0.0
    %331 = vmatpush1.xpose.msra.mxu0 0.0
    %332 = vmatprep.subr.mxu0 0.0
    %333 = vmatpush1.xpose.msra.mxu0 0.0
    %334 = vmatprep.subr.mxu0 0.0
    %335 = vmatpush1.xpose.msra.mxu0 0.0
    %336 = vmatprep.subr.mxu0 0.0
    %337 = vmatpush1.xpose.msra.mxu0 0.0
    %338 = vmatprep.subr.mxu0 0.0
    %339 = vmatpush1.xpose.msra.mxu0 0.0
    %340 = vmatprep.subr.mxu0 0.0
    %341 = vmatpush1.xpose.msra.mxu0 0.0
    %342 = vmatprep.subr.mxu0 0.0
    %343 = vmatpush1.xpose.msra.mxu0 0.0
    %344 = vmatprep.subr.mxu0 0.0
    %345 = vmatpush1.xpose.msra.mxu0 0.0
    %346 = vmatprep.subr.mxu0 0.0
    %347 = vmatpush1.xpose.msra.mxu0 0.0
    %348 = vmatprep.subr.mxu0 0.0
    %349 = vmatpush1.xpose.msra.mxu0 0.0
    %350 = vmatprep.subr.mxu0 0.0
    %351 = vmatpush1.xpose.msra.mxu0 0.0
    %352 = vmatprep.subr.mxu0 0.0
    %353 = vmatpush1.xpose.msra.mxu0 0.0
    %354 = vmatprep.subr.mxu0 0.0
    %355 = vmatpush1.xpose.msra.mxu0 0.0
    %356 = vmatprep.subr.mxu0 0.0
    %357 = vmatpush1.xpose.msra.mxu0 0.0
    %358 = vmatprep.subr.mxu0 0.0
    %359 = vmatpush1.xpose.msra.mxu0 0.0
    %360 = vmatprep.subr.mxu0 0.0
    %361 = vmatpush1.xpose.msra.mxu0 0.0
    %362 = vmatprep.subr.mxu0 0.0
    %363 = vmatpush1.xpose.msra.mxu0 0.0
    %364 = vmatprep.subr.mxu0 0.0
    %365 = vmatpush1.xpose.msra.mxu0 0.0
    %366 = vmatprep.subr.mxu0 0.0
    %367 = vmatpush1.xpose.msra.mxu0 0.0
    %368 = vmatprep.subr.mxu0 0.0
    %369 = vmatpush1.xpose.msra.mxu0 0.0
    %370 = vmatprep.subr.mxu0 0.0
    %371 = vmatpush1.xpose.msra.mxu0 0.0
    %372 = vmatprep.subr.mxu0 0.0
    %373 = vmatpush1.xpose.msra.mxu0 0.0
    %374 = vmatprep.subr.mxu0 0.0
    %375 = vmatpush1.xpose.msra.mxu0 0.0
    %376 = vmatprep.subr.mxu0 0.0
    %377 = vmatpush1.xpose.msra.mxu0 0.0
    %378 = vmatprep.subr.mxu0 0.0
    %379 = vmatpush1.xpose.msra.mxu0 0.0
    %380 = vmatprep.subr.mxu0 0.0
    %381 = vmatpush1.xpose.msra.mxu0 0.0
    %382 = vmatprep.subr.mxu0 0.0
    %383 = vmatpush1.xpose.msra.mxu0 0.0
    %384 = vmatprep.subr.mxu0 0.0
    %385 = vmatpush1.xpose.msra.mxu0 0.0
    %386 = vmatprep.subr.mxu0 0.0
    %387 = vmatpush1.xpose.msra.mxu0 0.0
    %388 = vmatprep.subr.mxu0 0.0
    %389 = vmatpush1.xpose.msra.mxu0 0.0
    %390 = vmatprep.subr.mxu0 0.0
    %391 = vmatpush1.xpose.msra.mxu0 0.0
    %392 = vmatprep.mubr.f32.mxu0 0.0
    %393 = vmatmul.mubr.f32.gmra.mrb[0].mxu0 %v324
    %v394 = vpop.f32.mrb[0].mxu0
    %v395 = vadd.f32 0.0, %v394
    %v396 = vpop.f32.mrb[0].mxu0
    %397 = vdwg.mxu0
    %v398 = vsel %vm151, %v395, -1e+30
    %v399 = vsel %vm156, %v398, -inf
    %400 = vmax.xlane.f32.xlu0 %v399
    %v401 = vpop.xlane.xlu0 %400
    %v402 = vsub.f32 %v398, %v401
    %v403 = vmul.f32 %v402, 1.442695
    %v404 = vpow.pop %v403
    %v405 = vsel %vm156, %v404, 0.0
    %406 = vadd.xlane.f32.xlu0 %v405
    %v407 = vpop.xlane.xlu0 %406
    %v408 = vrcp.pop %v407
    %v409 = vmul.f32 %v404, %v408
    %410 = vrot.lane.b32.xlu0 %v139, 56
    %v411 = vpop.permute.xlu0 %410
    %v414 = vsel %vm156, %v409, 0
    %416 = vmatprep.subr.mxu0 0.0
    %417 = vmatpush1.msra.mxu0 %v411
    %418 = vmatprep.subr.mxu0 0.0
    %419 = vmatpush1.msra.mxu0 0.0
    %420 = vmatprep.subr.mxu0 0.0
    %421 = vmatpush1.msra.mxu0 0.0
    %422 = vmatprep.subr.mxu0 0.0
    %423 = vmatpush1.msra.mxu0 0.0
    %424 = vmatprep.subr.mxu0 0.0
    %425 = vmatpush1.msra.mxu0 0.0
    %426 = vmatprep.subr.mxu0 0.0
    %427 = vmatpush1.msra.mxu0 0.0
    %428 = vmatprep.subr.mxu0 0.0
    %429 = vmatpush1.msra.mxu0 0.0
    %430 = vmatprep.subr.mxu0 0.0
    %431 = vmatpush1.msra.mxu0 0.0
    %432 = vmatprep.subr.mxu0 0.0
    %433 = vmatpush1.msra.mxu0 0.0
    %434 = vmatprep.subr.mxu0 0.0
    %435 = vmatpush1.msra.mxu0 0.0
    %436 = vmatprep.subr.mxu0 0.0
    %437 = vmatpush1.msra.mxu0 0.0
    %438 = vmatprep.subr.mxu0 0.0
    %439 = vmatpush1.msra.mxu0 0.0
    %440 = vmatprep.subr.mxu0 0.0
    %441 = vmatpush1.msra.mxu0 0.0
    %442 = vmatprep.subr.mxu0 0.0
    %443 = vmatpush1.msra.mxu0 0.0
    %444 = vmatprep.subr.mxu0 0.0
    %445 = vmatpush1.msra.mxu0 0.0
    %446 = vmatprep.subr.mxu0 0.0
    %447 = vmatpush1.msra.mxu0 0.0
    %448 = vmatprep.subr.mxu0 0.0
    %449 = vmatpush1.msra.mxu0 0.0
    %450 = vmatprep.subr.mxu0 0.0
    %451 = vmatpush1.msra.mxu0 0.0
    %452 = vmatprep.subr.mxu0 0.0
    %453 = vmatpush1.msra.mxu0 0.0
    %454 = vmatprep.subr.mxu0 0.0
    %455 = vmatpush1.msra.mxu0 0.0
    %456 = vmatprep.subr.mxu0 0.0
    %457 = vmatpush1.msra.mxu0 0.0
    %458 = vmatprep.subr.mxu0 0.0
    %459 = vmatpush1.msra.mxu0 0.0
    %460 = vmatprep.subr.mxu0 0.0
    %461 = vmatpush1.msra.mxu0 0.0
    %462 = vmatprep.subr.mxu0 0.0
    %463 = vmatpush1.msra.mxu0 0.0
    %464 = vmatprep.subr.mxu0 0.0
    %465 = vmatpush1.msra.mxu0 0.0
    %466 = vmatprep.subr.mxu0 0.0
    %467 = vmatpush1.msra.mxu0 0.0
    %468 = vmatprep.subr.mxu0 0.0
    %469 = vmatpush1.msra.mxu0 0.0
    %470 = vmatprep.subr.mxu0 0.0
    %471 = vmatpush1.msra.mxu0 0.0
    %472 = vmatprep.subr.mxu0 0.0
    %473 = vmatpush1.msra.mxu0 0.0
    %474 = vmatprep.subr.mxu0 0.0
    %475 = vmatpush1.msra.mxu0 0.0
    %476 = vmatprep.subr.mxu0 0.0
    %477 = vmatpush1.msra.mxu0 0.0
    %478 = vmatprep.subr.mxu0 0.0
    %479 = vmatpush1.msra.mxu0 0.0
    %480 = vmatprep.mubr.f32.mxu0 0.0
    %481 = vmatmul.mubr.f32.gmra.mrb[0].mxu0 %v414
    %v482 = vpop.f32.mrb[0].mxu0
    %v483 = vadd.f32 0.0, %v482
    %v484 = vpop.f32.mrb[0].mxu0
    %485 = vdwg.mxu0
    %s486 = scalar_lea.vmem [#allocation7], 8
    %v487 = vld [vmem:[%s486] sm:$0xff]
    %v489 = vsel %vm156, %v483, 0
    %491 = vmatprep.subr.mxu0 0.0
    %492 = vmatpush1.msra.mxu0 %v487
    %493 = vmatprep.subr.mxu0 0.0
    %494 = vmatpush1.msra.mxu0 0.0
    %495 = vmatprep.subr.mxu0 0.0
    %496 = vmatpush1.msra.mxu0 0.0
    %497 = vmatprep.subr.mxu0 0.0
    %498 = vmatpush1.msra.mxu0 0.0
    %499 = vmatprep.subr.mxu0 0.0
    %500 = vmatpush1.msra.mxu0 0.0
    %501 = vmatprep.subr.mxu0 0.0
    %502 = vmatpush1.msra.mxu0 0.0
    %503 = vmatprep.subr.mxu0 0.0
    %504 = vmatpush1.msra.mxu0 0.0
    %505 = vmatprep.subr.mxu0 0.0
    %506 = vmatpush1.msra.mxu0 0.0
    %507 = vmatprep.subr.mxu0 0.0
    %508 = vmatpush1.msra.mxu0 0.0
    %509 = vmatprep.subr.mxu0 0.0
    %510 = vmatpush1.msra.mxu0 0.0
    %511 = vmatprep.subr.mxu0 0.0
    %512 = vmatpush1.msra.mxu0 0.0
    %513 = vmatprep.subr.mxu0 0.0
    %514 = vmatpush1.msra.mxu0 0.0
    %515 = vmatprep.subr.mxu0 0.0
    %516 = vmatpush1.msra.mxu0 0.0
    %517 = vmatprep.subr.mxu0 0.0
    %518 = vmatpush1.msra.mxu0 0.0
    %519 = vmatprep.subr.mxu0 0.0
    %520 = vmatpush1.msra.mxu0 0.0
    %521 = vmatprep.subr.mxu0 0.0
    %522 = vmatpush1.msra.mxu0 0.0
    %523 = vmatprep.subr.mxu0 0.0
    %524 = vmatpush1.msra.mxu0 0.0
    %525 = vmatprep.subr.mxu0 0.0
    %526 = vmatpush1.msra.mxu0 0.0
    %527 = vmatprep.subr.mxu0 0.0
    %528 = vmatpush1.msra.mxu0 0.0
    %529 = vmatprep.subr.mxu0 0.0
    %530 = vmatpush1.msra.mxu0 0.0
    %531 = vmatprep.subr.mxu0 0.0
    %532 = vmatpush1.msra.mxu0 0.0
    %533 = vmatprep.subr.mxu0 0.0
    %534 = vmatpush1.msra.mxu0 0.0
    %535 = vmatprep.subr.mxu0 0.0
    %536 = vmatpush1.msra.mxu0 0.0
    %537 = vmatprep.subr.mxu0 0.0
    %538 = vmatpush1.msra.mxu0 0.0
    %539 = vmatprep.subr.mxu0 0.0
    %540 = vmatpush1.msra.mxu0 0.0
    %541 = vmatprep.subr.mxu0 0.0
    %542 = vmatpush1.msra.mxu0 0.0
    %543 = vmatprep.subr.mxu0 0.0
    %544 = vmatpush1.msra.mxu0 0.0
    %545 = vmatprep.subr.mxu0 0.0
    %546 = vmatpush1.msra.mxu0 0.0
    %547 = vmatprep.subr.mxu0 0.0
    %548 = vmatpush1.msra.mxu0 0.0
    %549 = vmatprep.subr.mxu0 0.0
    %550 = vmatpush1.msra.mxu0 0.0
    %551 = vmatprep.subr.mxu0 0.0
    %552 = vmatpush1.msra.mxu0 0.0
    %553 = vmatprep.subr.mxu0 0.0
    %554 = vmatpush1.msra.mxu0 0.0
    %555 = vmatprep.mubr.f32.mxu0 0.0
    %556 = vmatmul.mubr.f32.gmra.mrb[0].mxu0 %v489
    %v557 = vpop.f32.mrb[0].mxu0
    %v558 = vadd.f32 0.0, %v557
    %v559 = vpop.f32.mrb[0].mxu0
    %560 = vdwg.mxu0
    %v562 = vsel %vm156, %v316, 0
    %564 = vmatprep.subr.mxu0 0.0
    %565 = vmatpush1.msra.mxu0 %v319
    %566 = vmatprep.subr.mxu0 0.0
    %567 = vmatpush1.msra.mxu0 0.0
    %568 = vmatprep.subr.mxu0 0.0
    %569 = vmatpush1.msra.mxu0 0.0
    %570 = vmatprep.subr.mxu0 0.0
    %571 = vmatpush1.msra.mxu0 0.0
    %572 = vmatprep.subr.mxu0 0.0
    %573 = vmatpush1.msra.mxu0 0.0
    %574 = vmatprep.subr.mxu0 0.0
    %575 = vmatpush1.msra.mxu0 0.0
    %576 = vmatprep.subr.mxu0 0.0
    %577 = vmatpush1.msra.mxu0 0.0
    %578 = vmatprep.subr.mxu0 0.0
    %579 = vmatpush1.msra.mxu0 0.0
    %580 = vmatprep.subr.mxu0 0.0
    %581 = vmatpush1.msra.mxu0 0.0
    %582 = vmatprep.subr.mxu0 0.0
    %583 = vmatpush1.msra.mxu0 0.0
    %584 = vmatprep.subr.mxu0 0.0
    %585 = vmatpush1.msra.mxu0 0.0
    %586 = vmatprep.subr.mxu0 0.0
    %587 = vmatpush1.msra.mxu0 0.0
    %588 = vmatprep.subr.mxu0 0.0
    %589 = vmatpush1.msra.mxu0 0.0
    %590 = vmatprep.subr.mxu0 0.0
    %591 = vmatpush1.msra.mxu0 0.0
    %592 = vmatprep.subr.mxu0 0.0
    %593 = vmatpush1.msra.mxu0 0.0
    %594 = vmatprep.subr.mxu0 0.0
    %595 = vmatpush1.msra.mxu0 0.0
    %596 = vmatprep.subr.mxu0 0.0
    %597 = vmatpush1.msra.mxu0 0.0
    %598 = vmatprep.subr.mxu0 0.0
    %599 = vmatpush1.msra.mxu0 0.0
    %600 = vmatprep.subr.mxu0 0.0
    %601 = vmatpush1.msra.mxu0 0.0
    %602 = vmatprep.subr.mxu0 0.0
    %603 = vmatpush1.msra.mxu0 0.0
    %604 = vmatprep.subr.mxu0 0.0
    %605 = vmatpush1.msra.mxu0 0.0
    %606 = vmatprep.subr.mxu0 0.0
    %607 = vmatpush1.msra.mxu0 0.0
    %608 = vmatprep.subr.mxu0 0.0
    %609 = vmatpush1.msra.mxu0 0.0
    %610 = vmatprep.subr.mxu0 0.0
    %611 = vmatpush1.msra.mxu0 0.0
    %612 = vmatprep.subr.mxu0 0.0
    %613 = vmatpush1.msra.mxu0 0.0
    %614 = vmatprep.subr.mxu0 0.0
    %615 = vmatpush1.msra.mxu0 0.0
    %616 = vmatprep.subr.mxu0 0.0
    %617 = vmatpush1.msra.mxu0 0.0
    %618 = vmatprep.subr.mxu0 0.0
    %619 = vmatpush1.msra.mxu0 0.0
    %620 = vmatprep.subr.mxu0 0.0
    %621 = vmatpush1.msra.mxu0 0.0
    %622 = vmatprep.subr.mxu0 0.0
    %623 = vmatpush1.msra.mxu0 0.0
    %624 = vmatprep.subr.mxu0 0.0
    %625 = vmatpush1.msra.mxu0 0.0
    %626 = vmatprep.subr.mxu0 0.0
    %627 = vmatpush1.msra.mxu0 0.0
    %628 = vmatprep.mubr.f32.mxu0 0.0
    %629 = vmatmul.mubr.f32.gmra.mrb[0].mxu0 %v562
    %v630 = vpop.f32.mrb[0].mxu0
    %v631 = vadd.f32 %v558, %v630
    %v632 = vpop.f32.mrb[0].mxu0
    %633 = vdwg.mxu0
    %634 = vrot.lane.b32.xlu0 %v139, 80
    %v635 = vpop.permute.xlu0 %634
    %636 = vrot.lane.b32.xlu0 %v139, 112
    %v637 = vpop.permute.xlu0 %636
    %v638 = vsel %vm156, %v635, 0
    %v640 = vsel %vm156, %v637, 0
    %642 = vmatprep.subr.mxu0 0.0
    %643 = vmatpush1.xpose.msra.mxu0 %v640
    %644 = vmatprep.subr.mxu0 0.0
    %645 = vmatpush1.xpose.msra.mxu0 0.0
    %646 = vmatprep.subr.mxu0 0.0
    %647 = vmatpush1.xpose.msra.mxu0 0.0
    %648 = vmatprep.subr.mxu0 0.0
    %649 = vmatpush1.xpose.msra.mxu0 0.0
    %650 = vmatprep.subr.mxu0 0.0
    %651 = vmatpush1.xpose.msra.mxu0 0.0
    %652 = vmatprep.subr.mxu0 0.0
    %653 = vmatpush1.xpose.msra.mxu0 0.0
    %654 = vmatprep.subr.mxu0 0.0
    %655 = vmatpush1.xpose.msra.mxu0 0.0
    %656 = vmatprep.subr.mxu0 0.0
    %657 = vmatpush1.xpose.msra.mxu0 0.0
    %658 = vmatprep.subr.mxu0 0.0
    %659 = vmatpush1.xpose.msra.mxu0 0.0
    %660 = vmatprep.subr.mxu0 0.0
    %661 = vmatpush1.xpose.msra.mxu0 0.0
    %662 = vmatprep.subr.mxu0 0.0
    %663 = vmatpush1.xpose.msra.mxu0 0.0
    %664 = vmatprep.subr.mxu0 0.0
    %665 = vmatpush1.xpose.msra.mxu0 0.0
    %666 = vmatprep.subr.mxu0 0.0
    %667 = vmatpush1.xpose.msra.mxu0 0.0
    %668 = vmatprep.subr.mxu0 0.0
    %669 = vmatpush1.xpose.msra.mxu0 0.0
    %670 = vmatprep.subr.mxu0 0.0
    %671 = vmatpush1.xpose.msra.mxu0 0.0
    %672 = vmatprep.subr.mxu0 0.0
    %673 = vmatpush1.xpose.msra.mxu0 0.0
    %674 = vmatprep.subr.mxu0 0.0
    %675 = vmatpush1.xpose.msra.mxu0 0.0
    %676 = vmatprep.subr.mxu0 0.0
    %677 = vmatpush1.xpose.msra.mxu0 0.0
    %678 = vmatprep.subr.mxu0 0.0
    %679 = vmatpush1.xpose.msra.mxu0 0.0
    %680 = vmatprep.subr.mxu0 0.0
    %681 = vmatpush1.xpose.msra.mxu0 0.0
    %682 = vmatprep.subr.mxu0 0.0
    %683 = vmatpush1.xpose.msra.mxu0 0.0
    %684 = vmatprep.subr.mxu0 0.0
    %685 = vmatpush1.xpose.msra.mxu0 0.0
    %686 = vmatprep.subr.mxu0 0.0
    %687 = vmatpush1.xpose.msra.mxu0 0.0
    %688 = vmatprep.subr.mxu0 0.0
    %689 = vmatpush1.xpose.msra.mxu0 0.0
    %690 = vmatprep.subr.mxu0 0.0
    %691 = vmatpush1.xpose.msra.mxu0 0.0
    %692 = vmatprep.subr.mxu0 0.0
    %693 = vmatpush1.xpose.msra.mxu0 0.0
    %694 = vmatprep.subr.mxu0 0.0
    %695 = vmatpush1.xpose.msra.mxu0 0.0
    %696 = vmatprep.subr.mxu0 0.0
    %697 = vmatpush1.xpose.msra.mxu0 0.0
    %698 = vmatprep.subr.mxu0 0.0
    %699 = vmatpush1.xpose.msra.mxu0 0.0
    %700 = vmatprep.subr.mxu0 0.0
    %701 = vmatpush1.xpose.msra.mxu0 0.0
    %702 = vmatprep.subr.mxu0 0.0
    %703 = vmatpush1.xpose.msra.mxu0 0.0
    %704 = vmatprep.subr.mxu0 0.0
    %705 = vmatpush1.xpose.msra.mxu0 0.0
    %706 = vmatprep.mubr.f32.mxu0 0.0
    %707 = vmatmul.mubr.f32.gmra.mrb[0].mxu0 %v638
    %v708 = vpop.f32.mrb[0].mxu0
    %v709 = vadd.f32 0.0, %v708
    %v710 = vpop.f32.mrb[0].mxu0
    %711 = vdwg.mxu0
    %v712 = vsel %vm151, %v709, -1e+30
    %v713 = vsel %vm156, %v712, -inf
    %714 = vmax.xlane.f32.xlu0 %v713
    %v715 = vpop.xlane.xlu0 %714
    %v716 = vsub.f32 %v712, %v715
    %v717 = vmul.f32 %v716, 1.442695
    %v718 = vpow.pop %v717
    %v719 = vsel %vm156, %v718, 0.0
    %720 = vadd.xlane.f32.xlu0 %v719
    %v721 = vpop.xlane.xlu0 %720
    %v722 = vrcp.pop %v721
    %v723 = vmul.f32 %v718, %v722
    %724 = vrot.lane.b32.xlu0 %v139, 48
    %v725 = vpop.permute.xlu0 %724
    %v728 = vsel %vm156, %v723, 0
    %730 = vmatprep.subr.mxu0 0.0
    %731 = vmatpush1.msra.mxu0 %v725
    %732 = vmatprep.subr.mxu0 0.0
    %733 = vmatpush1.msra.mxu0 0.0
    %734 = vmatprep.subr.mxu0 0.0
    %735 = vmatpush1.msra.mxu0 0.0
    %736 = vmatprep.subr.mxu0 0.0
    %737 = vmatpush1.msra.mxu0 0.0
    %738 = vmatprep.subr.mxu0 0.0
    %739 = vmatpush1.msra.mxu0 0.0
    %740 = vmatprep.subr.mxu0 0.0
    %741 = vmatpush1.msra.mxu0 0.0
    %742 = vmatprep.subr.mxu0 0.0
    %743 = vmatpush1.msra.mxu0 0.0
    %744 = vmatprep.subr.mxu0 0.0
    %745 = vmatpush1.msra.mxu0 0.0
    %746 = vmatprep.subr.mxu0 0.0
    %747 = vmatpush1.msra.mxu0 0.0
    %748 = vmatprep.subr.mxu0 0.0
    %749 = vmatpush1.msra.mxu0 0.0
    %750 = vmatprep.subr.mxu0 0.0
    %751 = vmatpush1.msra.mxu0 0.0
    %752 = vmatprep.subr.mxu0 0.0
    %753 = vmatpush1.msra.mxu0 0.0
    %754 = vmatprep.subr.mxu0 0.0
    %755 = vmatpush1.msra.mxu0 0.0
    %756 = vmatprep.subr.mxu0 0.0
    %757 = vmatpush1.msra.mxu0 0.0
    %758 = vmatprep.subr.mxu0 0.0
    %759 = vmatpush1.msra.mxu0 0.0
    %760 = vmatprep.subr.mxu0 0.0
    %761 = vmatpush1.msra.mxu0 0.0
    %762 = vmatprep.subr.mxu0 0.0
    %763 = vmatpush1.msra.mxu0 0.0
    %764 = vmatprep.subr.mxu0 0.0
    %765 = vmatpush1.msra.mxu0 0.0
    %766 = vmatprep.subr.mxu0 0.0
    %767 = vmatpush1.msra.mxu0 0.0
    %768 = vmatprep.subr.mxu0 0.0
    %769 = vmatpush1.msra.mxu0 0.0
    %770 = vmatprep.subr.mxu0 0.0
    %771 = vmatpush1.msra.mxu0 0.0
    %772 = vmatprep.subr.mxu0 0.0
    %773 = vmatpush1.msra.mxu0 0.0
    %774 = vmatprep.subr.mxu0 0.0
    %775 = vmatpush1.msra.mxu0 0.0
    %776 = vmatprep.subr.mxu0 0.0
    %777 = vmatpush1.msra.mxu0 0.0
    %778 = vmatprep.subr.mxu0 0.0
    %779 = vmatpush1.msra.mxu0 0.0
    %780 = vmatprep.subr.mxu0 0.0
    %781 = vmatpush1.msra.mxu0 0.0
    %782 = vmatprep.subr.mxu0 0.0
    %783 = vmatpush1.msra.mxu0 0.0
    %784 = vmatprep.subr.mxu0 0.0
    %785 = vmatpush1.msra.mxu0 0.0
    %786 = vmatprep.subr.mxu0 0.0
    %787 = vmatpush1.msra.mxu0 0.0
    %788 = vmatprep.subr.mxu0 0.0
    %789 = vmatpush1.msra.mxu0 0.0
    %790 = vmatprep.subr.mxu0 0.0
    %791 = vmatpush1.msra.mxu0 0.0
    %792 = vmatprep.subr.mxu0 0.0
    %793 = vmatpush1.msra.mxu0 0.0
    %794 = vmatprep.mubr.f32.mxu0 0.0
    %795 = vmatmul.mubr.f32.gmra.mrb[0].mxu0 %v728
    %v796 = vpop.f32.mrb[0].mxu0
    %v797 = vadd.f32 0.0, %v796
    %v798 = vpop.f32.mrb[0].mxu0
    %799 = vdwg.mxu0
    %s800 = scalar_lea.vmem [#allocation7], 16
    %v801 = vld [vmem:[%s800] sm:$0xff]
    %v803 = vsel %vm156, %v797, 0
    %805 = vmatprep.subr.mxu0 0.0
    %806 = vmatpush1.msra.mxu0 %v801
    %807 = vmatprep.subr.mxu0 0.0
    %808 = vmatpush1.msra.mxu0 0.0
    %809 = vmatprep.subr.mxu0 0.0
    %810 = vmatpush1.msra.mxu0 0.0
    %811 = vmatprep.subr.mxu0 0.0
    %812 = vmatpush1.msra.mxu0 0.0
    %813 = vmatprep.subr.mxu0 0.0
    %814 = vmatpush1.msra.mxu0 0.0
    %815 = vmatprep.subr.mxu0 0.0
    %816 = vmatpush1.msra.mxu0 0.0
    %817 = vmatprep.subr.mxu0 0.0
    %818 = vmatpush1.msra.mxu0 0.0
    %819 = vmatprep.subr.mxu0 0.0
    %820 = vmatpush1.msra.mxu0 0.0
    %821 = vmatprep.subr.mxu0 0.0
    %822 = vmatpush1.msra.mxu0 0.0
    %823 = vmatprep.subr.mxu0 0.0
    %824 = vmatpush1.msra.mxu0 0.0
    %825 = vmatprep.subr.mxu0 0.0
    %826 = vmatpush1.msra.mxu0 0.0
    %827 = vmatprep.subr.mxu0 0.0
    %828 = vmatpush1.msra.mxu0 0.0
    %829 = vmatprep.subr.mxu0 0.0
    %830 = vmatpush1.msra.mxu0 0.0
    %831 = vmatprep.subr.mxu0 0.0
    %832 = vmatpush1.msra.mxu0 0.0
    %833 = vmatprep.subr.mxu0 0.0
    %834 = vmatpush1.msra.mxu0 0.0
    %835 = vmatprep.subr.mxu0 0.0
    %836 = vmatpush1.msra.mxu0 0.0
    %837 = vmatprep.subr.mxu0 0.0
    %838 = vmatpush1.msra.mxu0 0.0
    %839 = vmatprep.subr.mxu0 0.0
    %840 = vmatpush1.msra.mxu0 0.0
    %841 = vmatprep.subr.mxu0 0.0
    %842 = vmatpush1.msra.mxu0 0.0
    %843 = vmatprep.subr.mxu0 0.0
    %844 = vmatpush1.msra.mxu0 0.0
    %845 = vmatprep.subr.mxu0 0.0
    %846 = vmatpush1.msra.mxu0 0.0
    %847 = vmatprep.subr.mxu0 0.0
    %848 = vmatpush1.msra.mxu0 0.0
    %849 = vmatprep.subr.mxu0 0.0
    %850 = vmatpush1.msra.mxu0 0.0
    %851 = vmatprep.subr.mxu0 0.0
    %852 = vmatpush1.msra.mxu0 0.0
    %853 = vmatprep.subr.mxu0 0.0
    %854 = vmatpush1.msra.mxu0 0.0
    %855 = vmatprep.subr.mxu0 0.0
    %856 = vmatpush1.msra.mxu0 0.0
    %857 = vmatprep.subr.mxu0 0.0
    %858 = vmatpush1.msra.mxu0 0.0
    %859 = vmatprep.subr.mxu0 0.0
    %860 = vmatpush1.msra.mxu0 0.0
    %861 = vmatprep.subr.mxu0 0.0
    %862 = vmatpush1.msra.mxu0 0.0
    %863 = vmatprep.subr.mxu0 0.0
    %864 = vmatpush1.msra.mxu0 0.0
    %865 = vmatprep.subr.mxu0 0.0
    %866 = vmatpush1.msra.mxu0 0.0
    %867 = vmatprep.subr.mxu0 0.0
    %868 = vmatpush1.msra.mxu0 0.0
    %869 = vmatprep.mubr.f32.mxu0 0.0
    %870 = vmatmul.mubr.f32.gmra.mrb[0].mxu0 %v803
    %v871 = vpop.f32.mrb[0].mxu0
    %v872 = vadd.f32 0.0, %v871
    %v873 = vpop.f32.mrb[0].mxu0
    %874 = vdwg.mxu0
    %v875 = vadd.f32 %v631, %v872
    %876 = vrot.lane.b32.xlu0 %v139, 72
    %v877 = vpop.permute.xlu0 %876
    %878 = vrot.lane.b32.xlu0 %v139, 104
    %v879 = vpop.permute.xlu0 %878
    %v880 = vsel %vm156, %v877, 0
    %v882 = vsel %vm156, %v879, 0
    %884 = vmatprep.subr.mxu0 0.0
    %885 = vmatpush1.xpose.msra.mxu0 %v882
    %886 = vmatprep.subr.mxu0 0.0
    %887 = vmatpush1.xpose.msra.mxu0 0.0
    %888 = vmatprep.subr.mxu0 0.0
    %889 = vmatpush1.xpose.msra.mxu0 0.0
    %890 = vmatprep.subr.mxu0 0.0
    %891 = vmatpush1.xpose.msra.mxu0 0.0
    %892 = vmatprep.subr.mxu0 0.0
    %893 = vmatpush1.xpose.msra.mxu0 0.0
    %894 = vmatprep.subr.mxu0 0.0
    %895 = vmatpush1.xpose.msra.mxu0 0.0
    %896 = vmatprep.subr.mxu0 0.0
    %897 = vmatpush1.xpose.msra.mxu0 0.0
    %898 = vmatprep.subr.mxu0 0.0
    %899 = vmatpush1.xpose.msra.mxu0 0.0
    %900 = vmatprep.subr.mxu0 0.0
    %901 = vmatpush1.xpose.msra.mxu0 0.0
    %902 = vmatprep.subr.mxu0 0.0
    %903 = vmatpush1.xpose.msra.mxu0 0.0
    %904 = vmatprep.subr.mxu0 0.0
    %905 = vmatpush1.xpose.msra.mxu0 0.0
    %906 = vmatprep.subr.mxu0 0.0
    %907 = vmatpush1.xpose.msra.mxu0 0.0
    %908 = vmatprep.subr.mxu0 0.0
    %909 = vmatpush1.xpose.msra.mxu0 0.0
    %910 = vmatprep.subr.mxu0 0.0
    %911 = vmatpush1.xpose.msra.mxu0 0.0
    %912 = vmatprep.subr.mxu0 0.0
    %913 = vmatpush1.xpose.msra.mxu0 0.0
    %914 = vmatprep.subr.mxu0 0.0
    %915 = vmatpush1.xpose.msra.mxu0 0.0
    %916 = vmatprep.subr.mxu0 0.0
    %917 = vmatpush1.xpose.msra.mxu0 0.0
    %918 = vmatprep.subr.mxu0 0.0
    %919 = vmatpush1.xpose.msra.mxu0 0.0
    %920 = vmatprep.subr.mxu0 0.0
    %921 = vmatpush1.xpose.msra.mxu0 0.0
    %922 = vmatprep.subr.mxu0 0.0
    %923 = vmatpush1.xpose.msra.mxu0 0.0
    %924 = vmatprep.subr.mxu0 0.0
    %925 = vmatpush1.xpose.msra.mxu0 0.0
    %926 = vmatprep.subr.mxu0 0.0
    %927 = vmatpush1.xpose.msra.mxu0 0.0
    %928 = vmatprep.subr.mxu0 0.0
    %929 = vmatpush1.xpose.msra.mxu0 0.0
    %930 = vmatprep.subr.mxu0 0.0
    %931 = vmatpush1.xpose.msra.mxu0 0.0
    %932 = vmatprep.subr.mxu0 0.0
    %933 = vmatpush1.xpose.msra.mxu0 0.0
    %934 = vmatprep.subr.mxu0 0.0
    %935 = vmatpush1.xpose.msra.mxu0 0.0
    %936 = vmatprep.subr.mxu0 0.0
    %937 = vmatpush1.xpose.msra.mxu0 0.0
    %938 = vmatprep.subr.mxu0 0.0
    %939 = vmatpush1.xpose.msra.mxu0 0.0
    %940 = vmatprep.subr.mxu0 0.0
    %941 = vmatpush1.xpose.msra.mxu0 0.0
    %942 = vmatprep.subr.mxu0 0.0
    %943 = vmatpush1.xpose.msra.mxu0 0.0
    %944 = vmatprep.subr.mxu0 0.0
    %945 = vmatpush1.xpose.msra.mxu0 0.0
    %946 = vmatprep.subr.mxu0 0.0
    %947 = vmatpush1.xpose.msra.mxu0 0.0
    %948 = vmatprep.mubr.f32.mxu0 0.0
    %949 = vmatmul.mubr.f32.gmra.mrb[0].mxu0 %v880
    %v950 = vpop.f32.mrb[0].mxu0
    %v951 = vadd.f32 0.0, %v950
    %v952 = vpop.f32.mrb[0].mxu0
    %953 = vdwg.mxu0
    %v954 = vsel %vm151, %v951, -1e+30
    %v955 = vsel %vm156, %v954, -inf
    %956 = vmax.xlane.f32.xlu0 %v955
    %v957 = vpop.xlane.xlu0 %956
    %v958 = vsub.f32 %v954, %v957
    %v959 = vmul.f32 %v958, 1.442695
    %v960 = vpow.pop %v959
    %v961 = vsel %vm156, %v960, 0.0
    %962 = vadd.xlane.f32.xlu0 %v961
    %v963 = vpop.xlane.xlu0 %962
    %v964 = vrcp.pop %v963
    %v965 = vmul.f32 %v960, %v964
    %966 = vrot.lane.b32.xlu0 %v139, 40
    %v967 = vpop.permute.xlu0 %966
    %v970 = vsel %vm156, %v965, 0
    %972 = vmatprep.subr.mxu0 0.0
    %973 = vmatpush1.msra.mxu0 %v967
    %974 = vmatprep.subr.mxu0 0.0
    %975 = vmatpush1.msra.mxu0 0.0
    %976 = vmatprep.subr.mxu0 0.0
    %977 = vmatpush1.msra.mxu0 0.0
    %978 = vmatprep.subr.mxu0 0.0
    %979 = vmatpush1.msra.mxu0 0.0
    %980 = vmatprep.subr.mxu0 0.0
    %981 = vmatpush1.msra.mxu0 0.0
    %982 = vmatprep.subr.mxu0 0.0
    %983 = vmatpush1.msra.mxu0 0.0
    %984 = vmatprep.subr.mxu0 0.0
    %985 = vmatpush1.msra.mxu0 0.0
    %986 = vmatprep.subr.mxu0 0.0
    %987 = vmatpush1.msra.mxu0 0.0
    %988 = vmatprep.subr.mxu0 0.0
    %989 = vmatpush1.msra.mxu0 0.0
    %990 = vmatprep.subr.mxu0 0.0
    %991 = vmatpush1.msra.mxu0 0.0
    %992 = vmatprep.subr.mxu0 0.0
    %993 = vmatpush1.msra.mxu0 0.0
    %994 = vmatprep.subr.mxu0 0.0
    %995 = vmatpush1.msra.mxu0 0.0
    %996 = vmatprep.subr.mxu0 0.0
    %997 = vmatpush1.msra.mxu0 0.0
    %998 = vmatprep.subr.mxu0 0.0
    %999 = vmatpush1.msra.mxu0 0.0
    %1000 = vmatprep.subr.mxu0 0.0
    %1001 = vmatpush1.msra.mxu0 0.0
    %1002 = vmatprep.subr.mxu0 0.0
    %1003 = vmatpush1.msra.mxu0 0.0
    %1004 = vmatprep.subr.mxu0 0.0
    %1005 = vmatpush1.msra.mxu0 0.0
    %1006 = vmatprep.subr.mxu0 0.0
    %1007 = vmatpush1.msra.mxu0 0.0
    %1008 = vmatprep.subr.mxu0 0.0
    %1009 = vmatpush1.msra.mxu0 0.0
    %1010 = vmatprep.subr.mxu0 0.0
    %1011 = vmatpush1.msra.mxu0 0.0
    %1012 = vmatprep.subr.mxu0 0.0
    %1013 = vmatpush1.msra.mxu0 0.0
    %1014 = vmatprep.subr.mxu0 0.0
    %1015 = vmatpush1.msra.mxu0 0.0
    %1016 = vmatprep.subr.mxu0 0.0
    %1017 = vmatpush1.msra.mxu0 0.0
    %1018 = vmatprep.subr.mxu0 0.0
    %1019 = vmatpush1.msra.mxu0 0.0
    %1020 = vmatprep.subr.mxu0 0.0
    %1021 = vmatpush1.msra.mxu0 0.0
    %1022 = vmatprep.subr.mxu0 0.0
    %1023 = vmatpush1.msra.mxu0 0.0
    %1024 = vmatprep.subr.mxu0 0.0
    %1025 = vmatpush1.msra.mxu0 0.0
    %1026 = vmatprep.subr.mxu0 0.0
    %1027 = vmatpush1.msra.mxu0 0.0
    %1028 = vmatprep.subr.mxu0 0.0
    %1029 = vmatpush1.msra.mxu0 0.0
    %1030 = vmatprep.subr.mxu0 0.0
    %1031 = vmatpush1.msra.mxu0 0.0
    %1032 = vmatprep.subr.mxu0 0.0
    %1033 = vmatpush1.msra.mxu0 0.0
    %1034 = vmatprep.subr.mxu0 0.0
    %1035 = vmatpush1.msra.mxu0 0.0
    %1036 = vmatprep.mubr.f32.mxu0 0.0
    %1037 = vmatmul.mubr.f32.gmra.mrb[0].mxu0 %v970
    %v1038 = vpop.f32.mrb[0].mxu0
    %v1039 = vadd.f32 0.0, %v1038
    %v1040 = vpop.f32.mrb[0].mxu0
    %1041 = vdwg.mxu0
    %s1042 = scalar_lea.vmem [#allocation7], 24
    %v1043 = vld [vmem:[%s1042] sm:$0xff]
    %v1045 = vsel %vm156, %v1039, 0
    %1047 = vmatprep.subr.mxu0 0.0
    %1048 = vmatpush1.msra.mxu0 %v1043
    %1049 = vmatprep.subr.mxu0 0.0
    %1050 = vmatpush1.msra.mxu0 0.0
    %1051 = vmatprep.subr.mxu0 0.0
    %1052 = vmatpush1.msra.mxu0 0.0
    %1053 = vmatprep.subr.mxu0 0.0
    %1054 = vmatpush1.msra.mxu0 0.0
    %1055 = vmatprep.subr.mxu0 0.0
    %1056 = vmatpush1.msra.mxu0 0.0
    %1057 = vmatprep.subr.mxu0 0.0
    %1058 = vmatpush1.msra.mxu0 0.0
    %1059 = vmatprep.subr.mxu0 0.0
    %1060 = vmatpush1.msra.mxu0 0.0
    %1061 = vmatprep.subr.mxu0 0.0
    %1062 = vmatpush1.msra.mxu0 0.0
    %1063 = vmatprep.subr.mxu0 0.0
    %1064 = vmatpush1.msra.mxu0 0.0
    %1065 = vmatprep.subr.mxu0 0.0
    %1066 = vmatpush1.msra.mxu0 0.0
    %1067 = vmatprep.subr.mxu0 0.0
    %1068 = vmatpush1.msra.mxu0 0.0
    %1069 = vmatprep.subr.mxu0 0.0
    %1070 = vmatpush1.msra.mxu0 0.0
    %1071 = vmatprep.subr.mxu0 0.0
    %1072 = vmatpush1.msra.mxu0 0.0
    %1073 = vmatprep.subr.mxu0 0.0
    %1074 = vmatpush1.msra.mxu0 0.0
    %1075 = vmatprep.subr.mxu0 0.0
    %1076 = vmatpush1.msra.mxu0 0.0
    %1077 = vmatprep.subr.mxu0 0.0
    %1078 = vmatpush1.msra.mxu0 0.0
    %1079 = vmatprep.subr.mxu0 0.0
    %1080 = vmatpush1.msra.mxu0 0.0
    %1081 = vmatprep.subr.mxu0 0.0
    %1082 = vmatpush1.msra.mxu0 0.0
    %1083 = vmatprep.subr.mxu0 0.0
    %1084 = vmatpush1.msra.mxu0 0.0
    %1085 = vmatprep.subr.mxu0 0.0
    %1086 = vmatpush1.msra.mxu0 0.0
    %1087 = vmatprep.subr.mxu0 0.0
    %1088 = vmatpush1.msra.mxu0 0.0
    %1089 = vmatprep.subr.mxu0 0.0
    %1090 = vmatpush1.msra.mxu0 0.0
    %1091 = vmatprep.subr.mxu0 0.0
    %1092 = vmatpush1.msra.mxu0 0.0
    %1093 = vmatprep.subr.mxu0 0.0
    %1094 = vmatpush1.msra.mxu0 0.0
    %1095 = vmatprep.subr.mxu0 0.0
    %1096 = vmatpush1.msra.mxu0 0.0
    %1097 = vmatprep.subr.mxu0 0.0
    %1098 = vmatpush1.msra.mxu0 0.0
    %1099 = vmatprep.subr.mxu0 0.0
    %1100 = vmatpush1.msra.mxu0 0.0
    %1101 = vmatprep.subr.mxu0 0.0
    %1102 = vmatpush1.msra.mxu0 0.0
    %1103 = vmatprep.subr.mxu0 0.0
    %1104 = vmatpush1.msra.mxu0 0.0
    %1105 = vmatprep.subr.mxu0 0.0
    %1106 = vmatpush1.msra.mxu0 0.0
    %1107 = vmatprep.subr.mxu0 0.0
    %1108 = vmatpush1.msra.mxu0 0.0
    %1109 = vmatprep.subr.mxu0 0.0
    %1110 = vmatpush1.msra.mxu0 0.0
    %1111 = vmatprep.mubr.f32.mxu0 0.0
    %1112 = vmatmul.mubr.f32.gmra.mrb[0].mxu0 %v1045
    %v1113 = vpop.f32.mrb[0].mxu0
    %v1114 = vadd.f32 0.0, %v1113
    %v1115 = vpop.f32.mrb[0].mxu0
    %1116 = vdwg.mxu0
    %v1117 = vadd.f32 %v875, %v1114
    %v1119 = vlaneseq
    %v1120 = vshrl.u32 %v1119, 7
    %v1121 = vsub.s32 0, %v1120
    %v1122 = vrot.slane %v152, %v1121
    %v1124 = vadd.f32 %v1117, %v1122
    %1125 = vst.msk [vmem:[#allocation8] sm:$0xff] %vm65, %v1124
    %1127 = vrot.lane.b32.xlu0 %v144, 96
    %v1128 = vpop.permute.xlu0 %1127
    %v1129 = vsel %vm156, %v1128, 0
    %v1131 = vsel %vm156, %v144, 0
    %1133 = vmatprep.subr.mxu0 0.0
    %1134 = vmatpush1.xpose.msra.mxu0 %v1131
    %1135 = vmatprep.subr.mxu0 0.0
    %1136 = vmatpush1.xpose.msra.mxu0 0.0
    %1137 = vmatprep.subr.mxu0 0.0
    %1138 = vmatpush1.xpose.msra.mxu0 0.0
    %1139 = vmatprep.subr.mxu0 0.0
    %1140 = vmatpush1.xpose.msra.mxu0 0.0
    %1141 = vmatprep.subr.mxu0 0.0
    %1142 = vmatpush1.xpose.msra.mxu0 0.0
    %1143 = vmatprep.subr.mxu0 0.0
    %1144 = vmatpush1.xpose.msra.mxu0 0.0
    %1145 = vmatprep.subr.mxu0 0.0
    %1146 = vmatpush1.xpose.msra.mxu0 0.0
    %1147 = vmatprep.subr.mxu0 0.0
    %1148 = vmatpush1.xpose.msra.mxu0 0.0
    %1149 = vmatprep.subr.mxu0 0.0
    %1150 = vmatpush1.xpose.msra.mxu0 0.0
    %1151 = vmatprep.subr.mxu0 0.0
    %1152 = vmatpush1.xpose.msra.mxu0 0.0
    %1153 = vmatprep.subr.mxu0 0.0
    %1154 = vmatpush1.xpose.msra.mxu0 0.0
    %1155 = vmatprep.subr.mxu0 0.0
    %1156 = vmatpush1.xpose.msra.mxu0 0.0
    %1157 = vmatprep.subr.mxu0 0.0
    %1158 = vmatpush1.xpose.msra.mxu0 0.0
    %1159 = vmatprep.subr.mxu0 0.0
    %1160 = vmatpush1.xpose.msra.mxu0 0.0
    %1161 = vmatprep.subr.mxu0 0.0
    %1162 = vmatpush1.xpose.msra.mxu0 0.0
    %1163 = vmatprep.subr.mxu0 0.0
    %1164 = vmatpush1.xpose.msra.mxu0 0.0
    %1165 = vmatprep.subr.mxu0 0.0
    %1166 = vmatpush1.xpose.msra.mxu0 0.0
    %1167 = vmatprep.subr.mxu0 0.0
    %1168 = vmatpush1.xpose.msra.mxu0 0.0
    %1169 = vmatprep.subr.mxu0 0.0
    %1170 = vmatpush1.xpose.msra.mxu0 0.0
    %1171 = vmatprep.subr.mxu0 0.0
    %1172 = vmatpush1.xpose.msra.mxu0 0.0
    %1173 = vmatprep.subr.mxu0 0.0
    %1174 = vmatpush1.xpose.msra.mxu0 0.0
    %1175 = vmatprep.subr.mxu0 0.0
    %1176 = vmatpush1.xpose.msra.mxu0 0.0
    %1177 = vmatprep.subr.mxu0 0.0
    %1178 = vmatpush1.xpose.msra.mxu0 0.0
    %1179 = vmatprep.subr.mxu0 0.0
    %1180 = vmatpush1.xpose.msra.mxu0 0.0
    %1181 = vmatprep.subr.mxu0 0.0
    %1182 = vmatpush1.xpose.msra.mxu0 0.0
    %1183 = vmatprep.subr.mxu0 0.0
    %1184 = vmatpush1.xpose.msra.mxu0 0.0
    %1185 = vmatprep.subr.mxu0 0.0
    %1186 = vmatpush1.xpose.msra.mxu0 0.0
    %1187 = vmatprep.subr.mxu0 0.0
    %1188 = vmatpush1.xpose.msra.mxu0 0.0
    %1189 = vmatprep.subr.mxu0 0.0
    %1190 = vmatpush1.xpose.msra.mxu0 0.0
    %1191 = vmatprep.subr.mxu0 0.0
    %1192 = vmatpush1.xpose.msra.mxu0 0.0
    %1193 = vmatprep.subr.mxu0 0.0
    %1194 = vmatpush1.xpose.msra.mxu0 0.0
    %1195 = vmatprep.subr.mxu0 0.0
    %1196 = vmatpush1.xpose.msra.mxu0 0.0
    %1197 = vmatprep.mubr.f32.mxu0 0.0
    %1198 = vmatmul.mubr.f32.gmra.mrb[0].mxu0 %v1129
    %v1199 = vpop.f32.mrb[0].mxu0
    %v1200 = vadd.f32 0.0, %v1199
    %v1201 = vpop.f32.mrb[0].mxu0
    %1202 = vdwg.mxu0
    %v1203 = vsel %vm151, %v1200, -1e+30
    %v1204 = vsel %vm156, %v1203, -inf
    %1205 = vmax.xlane.f32.xlu0 %v1204
    %v1206 = vpop.xlane.xlu0 %1205
    %v1207 = vsub.f32 %v1203, %v1206
    %v1208 = vmul.f32 %v1207, 1.442695
    %v1209 = vpow.pop %v1208
    %v1210 = vsel %vm156, %v1209, 0.0
    %1211 = vadd.xlane.f32.xlu0 %v1210
    %v1212 = vpop.xlane.xlu0 %1211
    %v1213 = vrcp.pop %v1212
    %v1214 = vmul.f32 %v1209, %v1213
    %1215 = vrot.lane.b32.xlu0 %v144, 64
    %v1216 = vpop.permute.xlu0 %1215
    %v1219 = vsel %vm156, %v1214, 0
    %1221 = vmatprep.subr.mxu0 0.0
    %1222 = vmatpush1.msra.mxu0 %v1216
    %1223 = vmatprep.subr.mxu0 0.0
    %1224 = vmatpush1.msra.mxu0 0.0
    %1225 = vmatprep.subr.mxu0 0.0
    %1226 = vmatpush1.msra.mxu0 0.0
    %1227 = vmatprep.subr.mxu0 0.0
    %1228 = vmatpush1.msra.mxu0 0.0
    %1229 = vmatprep.subr.mxu0 0.0
    %1230 = vmatpush1.msra.mxu0 0.0
    %1231 = vmatprep.subr.mxu0 0.0
    %1232 = vmatpush1.msra.mxu0 0.0
    %1233 = vmatprep.subr.mxu0 0.0
    %1234 = vmatpush1.msra.mxu0 0.0
    %1235 = vmatprep.subr.mxu0 0.0
    %1236 = vmatpush1.msra.mxu0 0.0
    %1237 = vmatprep.subr.mxu0 0.0
    %1238 = vmatpush1.msra.mxu0 0.0
    %1239 = vmatprep.subr.mxu0 0.0
    %1240 = vmatpush1.msra.mxu0 0.0
    %1241 = vmatprep.subr.mxu0 0.0
    %1242 = vmatpush1.msra.mxu0 0.0
    %1243 = vmatprep.subr.mxu0 0.0
    %1244 = vmatpush1.msra.mxu0 0.0
    %1245 = vmatprep.subr.mxu0 0.0
    %1246 = vmatpush1.msra.mxu0 0.0
    %1247 = vmatprep.subr.mxu0 0.0
    %1248 = vmatpush1.msra.mxu0 0.0
    %1249 = vmatprep.subr.mxu0 0.0
    %1250 = vmatpush1.msra.mxu0 0.0
    %1251 = vmatprep.subr.mxu0 0.0
    %1252 = vmatpush1.msra.mxu0 0.0
    %1253 = vmatprep.subr.mxu0 0.0
    %1254 = vmatpush1.msra.mxu0 0.0
    %1255 = vmatprep.subr.mxu0 0.0
    %1256 = vmatpush1.msra.mxu0 0.0
    %1257 = vmatprep.subr.mxu0 0.0
    %1258 = vmatpush1.msra.mxu0 0.0
    %1259 = vmatprep.subr.mxu0 0.0
    %1260 = vmatpush1.msra.mxu0 0.0
    %1261 = vmatprep.subr.mxu0 0.0
    %1262 = vmatpush1.msra.mxu0 0.0
    %1263 = vmatprep.subr.mxu0 0.0
    %1264 = vmatpush1.msra.mxu0 0.0
    %1265 = vmatprep.subr.mxu0 0.0
    %1266 = vmatpush1.msra.mxu0 0.0
    %1267 = vmatprep.subr.mxu0 0.0
    %1268 = vmatpush1.msra.mxu0 0.0
    %1269 = vmatprep.subr.mxu0 0.0
    %1270 = vmatpush1.msra.mxu0 0.0
    %1271 = vmatprep.subr.mxu0 0.0
    %1272 = vmatpush1.msra.mxu0 0.0
    %1273 = vmatprep.subr.mxu0 0.0
    %1274 = vmatpush1.msra.mxu0 0.0
    %1275 = vmatprep.subr.mxu0 0.0
    %1276 = vmatpush1.msra.mxu0 0.0
    %1277 = vmatprep.subr.mxu0 0.0
    %1278 = vmatpush1.msra.mxu0 0.0
    %1279 = vmatprep.subr.mxu0 0.0
    %1280 = vmatpush1.msra.mxu0 0.0
    %1281 = vmatprep.subr.mxu0 0.0
    %1282 = vmatpush1.msra.mxu0 0.0
    %1283 = vmatprep.subr.mxu0 0.0
    %1284 = vmatpush1.msra.mxu0 0.0
    %1285 = vmatprep.mubr.f32.mxu0 0.0
    %1286 = vmatmul.mubr.f32.gmra.mrb[0].mxu0 %v1219
    %v1287 = vpop.f32.mrb[0].mxu0
    %v1288 = vadd.f32 0.0, %v1287
    %v1289 = vpop.f32.mrb[0].mxu0
    %1290 = vdwg.mxu0
    %v1291 = vld [vmem:[#allocation7] sm:$0xff]
    %1292 = vrot.lane.b32.xlu0 %v144, 88
    %v1293 = vpop.permute.xlu0 %1292
    %1294 = vrot.lane.b32.xlu0 %v144, 120
    %v1295 = vpop.permute.xlu0 %1294
    %v1296 = vsel %vm156, %v1293, 0
    %v1298 = vsel %vm156, %v1295, 0
    %1300 = vmatprep.subr.mxu0 0.0
    %1301 = vmatpush1.xpose.msra.mxu0 %v1298
    %1302 = vmatprep.subr.mxu0 0.0
    %1303 = vmatpush1.xpose.msra.mxu0 0.0
    %1304 = vmatprep.subr.mxu0 0.0
    %1305 = vmatpush1.xpose.msra.mxu0 0.0
    %1306 = vmatprep.subr.mxu0 0.0
    %1307 = vmatpush1.xpose.msra.mxu0 0.0
    %1308 = vmatprep.subr.mxu0 0.0
    %1309 = vmatpush1.xpose.msra.mxu0 0.0
    %1310 = vmatprep.subr.mxu0 0.0
    %1311 = vmatpush1.xpose.msra.mxu0 0.0
    %1312 = vmatprep.subr.mxu0 0.0
    %1313 = vmatpush1.xpose.msra.mxu0 0.0
    %1314 = vmatprep.subr.mxu0 0.0
    %1315 = vmatpush1.xpose.msra.mxu0 0.0
    %1316 = vmatprep.subr.mxu0 0.0
    %1317 = vmatpush1.xpose.msra.mxu0 0.0
    %1318 = vmatprep.subr.mxu0 0.0
    %1319 = vmatpush1.xpose.msra.mxu0 0.0
    %1320 = vmatprep.subr.mxu0 0.0
    %1321 = vmatpush1.xpose.msra.mxu0 0.0
    %1322 = vmatprep.subr.mxu0 0.0
    %1323 = vmatpush1.xpose.msra.mxu0 0.0
    %1324 = vmatprep.subr.mxu0 0.0
    %1325 = vmatpush1.xpose.msra.mxu0 0.0
    %1326 = vmatprep.subr.mxu0 0.0
    %1327 = vmatpush1.xpose.msra.mxu0 0.0
    %1328 = vmatprep.subr.mxu0 0.0
    %1329 = vmatpush1.xpose.msra.mxu0 0.0
    %1330 = vmatprep.subr.mxu0 0.0
    %1331 = vmatpush1.xpose.msra.mxu0 0.0
    %1332 = vmatprep.subr.mxu0 0.0
    %1333 = vmatpush1.xpose.msra.mxu0 0.0
    %1334 = vmatprep.subr.mxu0 0.0
    %1335 = vmatpush1.xpose.msra.mxu0 0.0
    %1336 = vmatprep.subr.mxu0 0.0
    %1337 = vmatpush1.xpose.msra.mxu0 0.0
    %1338 = vmatprep.subr.mxu0 0.0
    %1339 = vmatpush1.xpose.msra.mxu0 0.0
    %1340 = vmatprep.subr.mxu0 0.0
    %1341 = vmatpush1.xpose.msra.mxu0 0.0
    %1342 = vmatprep.subr.mxu0 0.0
    %1343 = vmatpush1.xpose.msra.mxu0 0.0
    %1344 = vmatprep.subr.mxu0 0.0
    %1345 = vmatpush1.xpose.msra.mxu0 0.0
    %1346 = vmatprep.subr.mxu0 0.0
    %1347 = vmatpush1.xpose.msra.mxu0 0.0
    %1348 = vmatprep.subr.mxu0 0.0
    %1349 = vmatpush1.xpose.msra.mxu0 0.0
    %1350 = vmatprep.subr.mxu0 0.0
    %1351 = vmatpush1.xpose.msra.mxu0 0.0
    %1352 = vmatprep.subr.mxu0 0.0
    %1353 = vmatpush1.xpose.msra.mxu0 0.0
    %1354 = vmatprep.subr.mxu0 0.0
    %1355 = vmatpush1.xpose.msra.mxu0 0.0
    %1356 = vmatprep.subr.mxu0 0.0
    %1357 = vmatpush1.xpose.msra.mxu0 0.0
    %1358 = vmatprep.subr.mxu0 0.0
    %1359 = vmatpush1.xpose.msra.mxu0 0.0
    %1360 = vmatprep.subr.mxu0 0.0
    %1361 = vmatpush1.xpose.msra.mxu0 0.0
    %1362 = vmatprep.subr.mxu0 0.0
    %1363 = vmatpush1.xpose.msra.mxu0 0.0
    %1364 = vmatprep.mubr.f32.mxu0 0.0
    %1365 = vmatmul.mubr.f32.gmra.mrb[0].mxu0 %v1296
    %v1366 = vpop.f32.mrb[0].mxu0
    %v1367 = vadd.f32 0.0, %v1366
    %v1368 = vpop.f32.mrb[0].mxu0
    %1369 = vdwg.mxu0
    %v1370 = vsel %vm151, %v1367, -1e+30
    %v1371 = vsel %vm156, %v1370, -inf
    %1372 = vmax.xlane.f32.xlu0 %v1371
    %v1373 = vpop.xlane.xlu0 %1372
    %v1374 = vsub.f32 %v1370, %v1373
    %v1375 = vmul.f32 %v1374, 1.442695
    %v1376 = vpow.pop %v1375
    %v1377 = vsel %vm156, %v1376, 0.0
    %1378 = vadd.xlane.f32.xlu0 %v1377
    %v1379 = vpop.xlane.xlu0 %1378
    %v1380 = vrcp.pop %v1379
    %v1381 = vmul.f32 %v1376, %v1380
    %1382 = vrot.lane.b32.xlu0 %v144, 56
    %v1383 = vpop.permute.xlu0 %1382
    %v1386 = vsel %vm156, %v1381, 0
    %1388 = vmatprep.subr.mxu0 0.0
    %1389 = vmatpush1.msra.mxu0 %v1383
    %1390 = vmatprep.subr.mxu0 0.0
    %1391 = vmatpush1.msra.mxu0 0.0
    %1392 = vmatprep.subr.mxu0 0.0
    %1393 = vmatpush1.msra.mxu0 0.0
    %1394 = vmatprep.subr.mxu0 0.0
    %1395 = vmatpush1.msra.mxu0 0.0
    %1396 = vmatprep.subr.mxu0 0.0
    %1397 = vmatpush1.msra.mxu0 0.0
    %1398 = vmatprep.subr.mxu0 0.0
    %1399 = vmatpush1.msra.mxu0 0.0
    %1400 = vmatprep.subr.mxu0 0.0
    %1401 = vmatpush1.msra.mxu0 0.0
    %1402 = vmatprep.subr.mxu0 0.0
    %1403 = vmatpush1.msra.mxu0 0.0
    %1404 = vmatprep.subr.mxu0 0.0
    %1405 = vmatpush1.msra.mxu0 0.0
    %1406 = vmatprep.subr.mxu0 0.0
    %1407 = vmatpush1.msra.mxu0 0.0
    %1408 = vmatprep.subr.mxu0 0.0
    %1409 = vmatpush1.msra.mxu0 0.0
    %1410 = vmatprep.subr.mxu0 0.0
    %1411 = vmatpush1.msra.mxu0 0.0
    %1412 = vmatprep.subr.mxu0 0.0
    %1413 = vmatpush1.msra.mxu0 0.0
    %1414 = vmatprep.subr.mxu0 0.0
    %1415 = vmatpush1.msra.mxu0 0.0
    %1416 = vmatprep.subr.mxu0 0.0
    %1417 = vmatpush1.msra.mxu0 0.0
    %1418 = vmatprep.subr.mxu0 0.0
    %1419 = vmatpush1.msra.mxu0 0.0
    %1420 = vmatprep.subr.mxu0 0.0
    %1421 = vmatpush1.msra.mxu0 0.0
    %1422 = vmatprep.subr.mxu0 0.0
    %1423 = vmatpush1.msra.mxu0 0.0
    %1424 = vmatprep.subr.mxu0 0.0
    %1425 = vmatpush1.msra.mxu0 0.0
    %1426 = vmatprep.subr.mxu0 0.0
    %1427 = vmatpush1.msra.mxu0 0.0
    %1428 = vmatprep.subr.mxu0 0.0
    %1429 = vmatpush1.msra.mxu0 0.0
    %1430 = vmatprep.subr.mxu0 0.0
    %1431 = vmatpush1.msra.mxu0 0.0
    %1432 = vmatprep.subr.mxu0 0.0
    %1433 = vmatpush1.msra.mxu0 0.0
    %1434 = vmatprep.subr.mxu0 0.0
    %1435 = vmatpush1.msra.mxu0 0.0
    %1436 = vmatprep.subr.mxu0 0.0
    %1437 = vmatpush1.msra.mxu0 0.0
    %1438 = vmatprep.subr.mxu0 0.0
    %1439 = vmatpush1.msra.mxu0 0.0
    %1440 = vmatprep.subr.mxu0 0.0
    %1441 = vmatpush1.msra.mxu0 0.0
    %1442 = vmatprep.subr.mxu0 0.0
    %1443 = vmatpush1.msra.mxu0 0.0
    %1444 = vmatprep.subr.mxu0 0.0
    %1445 = vmatpush1.msra.mxu0 0.0
    %1446 = vmatprep.subr.mxu0 0.0
    %1447 = vmatpush1.msra.mxu0 0.0
    %1448 = vmatprep.subr.mxu0 0.0
    %1449 = vmatpush1.msra.mxu0 0.0
    %1450 = vmatprep.subr.mxu0 0.0
    %1451 = vmatpush1.msra.mxu0 0.0
    %1452 = vmatprep.mubr.f32.mxu0 0.0
    %1453 = vmatmul.mubr.f32.gmra.mrb[0].mxu0 %v1386
    %v1454 = vpop.f32.mrb[0].mxu0
    %v1455 = vadd.f32 0.0, %v1454
    %v1456 = vpop.f32.mrb[0].mxu0
    %1457 = vdwg.mxu0
    %v1458 = vld [vmem:[%s486] sm:$0xff]
    %v1460 = vsel %vm156, %v1455, 0
    %1462 = vmatprep.subr.mxu0 0.0
    %1463 = vmatpush1.msra.mxu0 %v1458
    %1464 = vmatprep.subr.mxu0 0.0
    %1465 = vmatpush1.msra.mxu0 0.0
    %1466 = vmatprep.subr.mxu0 0.0
    %1467 = vmatpush1.msra.mxu0 0.0
    %1468 = vmatprep.subr.mxu0 0.0
    %1469 = vmatpush1.msra.mxu0 0.0
    %1470 = vmatprep.subr.mxu0 0.0
    %1471 = vmatpush1.msra.mxu0 0.0
    %1472 = vmatprep.subr.mxu0 0.0
    %1473 = vmatpush1.msra.mxu0 0.0
    %1474 = vmatprep.subr.mxu0 0.0
    %1475 = vmatpush1.msra.mxu0 0.0
    %1476 = vmatprep.subr.mxu0 0.0
    %1477 = vmatpush1.msra.mxu0 0.0
    %1478 = vmatprep.subr.mxu0 0.0
    %1479 = vmatpush1.msra.mxu0 0.0
    %1480 = vmatprep.subr.mxu0 0.0
    %1481 = vmatpush1.msra.mxu0 0.0
    %1482 = vmatprep.subr.mxu0 0.0
    %1483 = vmatpush1.msra.mxu0 0.0
    %1484 = vmatprep.subr.mxu0 0.0
    %1485 = vmatpush1.msra.mxu0 0.0
    %1486 = vmatprep.subr.mxu0 0.0
    %1487 = vmatpush1.msra.mxu0 0.0
    %1488 = vmatprep.subr.mxu0 0.0
    %1489 = vmatpush1.msra.mxu0 0.0
    %1490 = vmatprep.subr.mxu0 0.0
    %1491 = vmatpush1.msra.mxu0 0.0
    %1492 = vmatprep.subr.mxu0 0.0
    %1493 = vmatpush1.msra.mxu0 0.0
    %1494 = vmatprep.subr.mxu0 0.0
    %1495 = vmatpush1.msra.mxu0 0.0
    %1496 = vmatprep.subr.mxu0 0.0
    %1497 = vmatpush1.msra.mxu0 0.0
    %1498 = vmatprep.subr.mxu0 0.0
    %1499 = vmatpush1.msra.mxu0 0.0
    %1500 = vmatprep.subr.mxu0 0.0
    %1501 = vmatpush1.msra.mxu0 0.0
    %1502 = vmatprep.subr.mxu0 0.0
    %1503 = vmatpush1.msra.mxu0 0.0
    %1504 = vmatprep.subr.mxu0 0.0
    %1505 = vmatpush1.msra.mxu0 0.0
    %1506 = vmatprep.subr.mxu0 0.0
    %1507 = vmatpush1.msra.mxu0 0.0
    %1508 = vmatprep.subr.mxu0 0.0
    %1509 = vmatpush1.msra.mxu0 0.0
    %1510 = vmatprep.subr.mxu0 0.0
    %1511 = vmatpush1.msra.mxu0 0.0
    %1512 = vmatprep.subr.mxu0 0.0
    %1513 = vmatpush1.msra.mxu0 0.0
    %1514 = vmatprep.subr.mxu0 0.0
    %1515 = vmatpush1.msra.mxu0 0.0
    %1516 = vmatprep.subr.mxu0 0.0
    %1517 = vmatpush1.msra.mxu0 0.0
    %1518 = vmatprep.subr.mxu0 0.0
    %1519 = vmatpush1.msra.mxu0 0.0
    %1520 = vmatprep.subr.mxu0 0.0
    %1521 = vmatpush1.msra.mxu0 0.0
    %1522 = vmatprep.subr.mxu0 0.0
    %1523 = vmatpush1.msra.mxu0 0.0
    %1524 = vmatprep.subr.mxu0 0.0
    %1525 = vmatpush1.msra.mxu0 0.0
    %1526 = vmatprep.mubr.f32.mxu0 0.0
    %1527 = vmatmul.mubr.f32.gmra.mrb[0].mxu0 %v1460
    %v1528 = vpop.f32.mrb[0].mxu0
    %v1529 = vadd.f32 0.0, %v1528
    %v1530 = vpop.f32.mrb[0].mxu0
    %1531 = vdwg.mxu0
    %v1533 = vsel %vm156, %v1288, 0
    %1535 = vmatprep.subr.mxu0 0.0
    %1536 = vmatpush1.msra.mxu0 %v1291
    %1537 = vmatprep.subr.mxu0 0.0
    %1538 = vmatpush1.msra.mxu0 0.0
    %1539 = vmatprep.subr.mxu0 0.0
    %1540 = vmatpush1.msra.mxu0 0.0
    %1541 = vmatprep.subr.mxu0 0.0
    %1542 = vmatpush1.msra.mxu0 0.0
    %1543 = vmatprep.subr.mxu0 0.0
    %1544 = vmatpush1.msra.mxu0 0.0
    %1545 = vmatprep.subr.mxu0 0.0
    %1546 = vmatpush1.msra.mxu0 0.0
    %1547 = vmatprep.subr.mxu0 0.0
    %1548 = vmatpush1.msra.mxu0 0.0
    %1549 = vmatprep.subr.mxu0 0.0
    %1550 = vmatpush1.msra.mxu0 0.0
    %1551 = vmatprep.subr.mxu0 0.0
    %1552 = vmatpush1.msra.mxu0 0.0
    %1553 = vmatprep.subr.mxu0 0.0
    %1554 = vmatpush1.msra.mxu0 0.0
    %1555 = vmatprep.subr.mxu0 0.0
    %1556 = vmatpush1.msra.mxu0 0.0
    %1557 = vmatprep.subr.mxu0 0.0
    %1558 = vmatpush1.msra.mxu0 0.0
    %1559 = vmatprep.subr.mxu0 0.0
    %1560 = vmatpush1.msra.mxu0 0.0
    %1561 = vmatprep.subr.mxu0 0.0
    %1562 = vmatpush1.msra.mxu0 0.0
    %1563 = vmatprep.subr.mxu0 0.0
    %1564 = vmatpush1.msra.mxu0 0.0
    %1565 = vmatprep.subr.mxu0 0.0
    %1566 = vmatpush1.msra.mxu0 0.0
    %1567 = vmatprep.subr.mxu0 0.0
    %1568 = vmatpush1.msra.mxu0 0.0
    %1569 = vmatprep.subr.mxu0 0.0
    %1570 = vmatpush1.msra.mxu0 0.0
    %1571 = vmatprep.subr.mxu0 0.0
    %1572 = vmatpush1.msra.mxu0 0.0
    %1573 = vmatprep.subr.mxu0 0.0
    %1574 = vmatpush1.msra.mxu0 0.0
    %1575 = vmatprep.subr.mxu0 0.0
    %1576 = vmatpush1.msra.mxu0 0.0
    %1577 = vmatprep.subr.mxu0 0.0
    %1578 = vmatpush1.msra.mxu0 0.0
    %1579 = vmatprep.subr.mxu0 0.0
    %1580 = vmatpush1.msra.mxu0 0.0
    %1581 = vmatprep.subr.mxu0 0.0
    %1582 = vmatpush1.msra.mxu0 0.0
    %1583 = vmatprep.subr.mxu0 0.0
    %1584 = vmatpush1.msra.mxu0 0.0
    %1585 = vmatprep.subr.mxu0 0.0
    %1586 = vmatpush1.msra.mxu0 0.0
    %1587 = vmatprep.subr.mxu0 0.0
    %1588 = vmatpush1.msra.mxu0 0.0
    %1589 = vmatprep.subr.mxu0 0.0
    %1590 = vmatpush1.msra.mxu0 0.0
    %1591 = vmatprep.subr.mxu0 0.0
    %1592 = vmatpush1.msra.mxu0 0.0
    %1593 = vmatprep.subr.mxu0 0.0
    %1594 = vmatpush1.msra.mxu0 0.0
    %1595 = vmatprep.subr.mxu0 0.0
    %1596 = vmatpush1.msra.mxu0 0.0
    %1597 = vmatprep.subr.mxu0 0.0
    %1598 = vmatpush1.msra.mxu0 0.0
    %1599 = vmatprep.mubr.f32.mxu0 0.0
    %1600 = vmatmul.mubr.f32.gmra.mrb[0].mxu0 %v1533
    %v1601 = vpop.f32.mrb[0].mxu0
    %v1602 = vadd.f32 %v1529, %v1601
    %v1603 = vpop.f32.mrb[0].mxu0
    %1604 = vdwg.mxu0
    %1605 = vrot.lane.b32.xlu0 %v144, 80
    %v1606 = vpop.permute.xlu0 %1605
    %1607 = vrot.lane.b32.xlu0 %v144, 112
    %v1608 = vpop.permute.xlu0 %1607
    %v1609 = vsel %vm156, %v1606, 0
    %v1611 = vsel %vm156, %v1608, 0
    %1613 = vmatprep.subr.mxu0 0.0
    %1614 = vmatpush1.xpose.msra.mxu0 %v1611
    %1615 = vmatprep.subr.mxu0 0.0
    %1616 = vmatpush1.xpose.msra.mxu0 0.0
    %1617 = vmatprep.subr.mxu0 0.0
    %1618 = vmatpush1.xpose.msra.mxu0 0.0
    %1619 = vmatprep.subr.mxu0 0.0
    %1620 = vmatpush1.xpose.msra.mxu0 0.0
    %1621 = vmatprep.subr.mxu0 0.0
    %1622 = vmatpush1.xpose.msra.mxu0 0.0
    %1623 = vmatprep.subr.mxu0 0.0
    %1624 = vmatpush1.xpose.msra.mxu0 0.0
    %1625 = vmatprep.subr.mxu0 0.0
    %1626 = vmatpush1.xpose.msra.mxu0 0.0
    %1627 = vmatprep.subr.mxu0 0.0
    %1628 = vmatpush1.xpose.msra.mxu0 0.0
    %1629 = vmatprep.subr.mxu0 0.0
    %1630 = vmatpush1.xpose.msra.mxu0 0.0
    %1631 = vmatprep.subr.mxu0 0.0
    %1632 = vmatpush1.xpose.msra.mxu0 0.0
    %1633 = vmatprep.subr.mxu0 0.0
    %1634 = vmatpush1.xpose.msra.mxu0 0.0
    %1635 = vmatprep.subr.mxu0 0.0
    %1636 = vmatpush1.xpose.msra.mxu0 0.0
    %1637 = vmatprep.subr.mxu0 0.0
    %1638 = vmatpush1.xpose.msra.mxu0 0.0
    %1639 = vmatprep.subr.mxu0 0.0
    %1640 = vmatpush1.xpose.msra.mxu0 0.0
    %1641 = vmatprep.subr.mxu0 0.0
    %1642 = vmatpush1.xpose.msra.mxu0 0.0
    %1643 = vmatprep.subr.mxu0 0.0
    %1644 = vmatpush1.xpose.msra.mxu0 0.0
    %1645 = vmatprep.subr.mxu0 0.0
    %1646 = vmatpush1.xpose.msra.mxu0 0.0
    %1647 = vmatprep.subr.mxu0 0.0
    %1648 = vmatpush1.xpose.msra.mxu0 0.0
    %1649 = vmatprep.subr.mxu0 0.0
    %1650 = vmatpush1.xpose.msra.mxu0 0.0
    %1651 = vmatprep.subr.mxu0 0.0
    %1652 = vmatpush1.xpose.msra.mxu0 0.0
    %1653 = vmatprep.subr.mxu0 0.0
    %1654 = vmatpush1.xpose.msra.mxu0 0.0
    %1655 = vmatprep.subr.mxu0 0.0
    %1656 = vmatpush1.xpose.msra.mxu0 0.0
    %1657 = vmatprep.subr.mxu0 0.0
    %1658 = vmatpush1.xpose.msra.mxu0 0.0
    %1659 = vmatprep.subr.mxu0 0.0
    %1660 = vmatpush1.xpose.msra.mxu0 0.0
    %1661 = vmatprep.subr.mxu0 0.0
    %1662 = vmatpush1.xpose.msra.mxu0 0.0
    %1663 = vmatprep.subr.mxu0 0.0
    %1664 = vmatpush1.xpose.msra.mxu0 0.0
    %1665 = vmatprep.subr.mxu0 0.0
    %1666 = vmatpush1.xpose.msra.mxu0 0.0
    %1667 = vmatprep.subr.mxu0 0.0
    %1668 = vmatpush1.xpose.msra.mxu0 0.0
    %1669 = vmatprep.subr.mxu0 0.0
    %1670 = vmatpush1.xpose.msra.mxu0 0.0
    %1671 = vmatprep.subr.mxu0 0.0
    %1672 = vmatpush1.xpose.msra.mxu0 0.0
    %1673 = vmatprep.subr.mxu0 0.0
    %1674 = vmatpush1.xpose.msra.mxu0 0.0
    %1675 = vmatprep.subr.mxu0 0.0
    %1676 = vmatpush1.xpose.msra.mxu0 0.0
    %1677 = vmatprep.mubr.f32.mxu0 0.0
    %1678 = vmatmul.mubr.f32.gmra.mrb[0].mxu0 %v1609
    %v1679 = vpop.f32.mrb[0].mxu0
    %v1680 = vadd.f32 0.0, %v1679
    %v1681 = vpop.f32.mrb[0].mxu0
    %1682 = vdwg.mxu0
    %v1683 = vsel %vm151, %v1680, -1e+30
    %v1684 = vsel %vm156, %v1683, -inf
    %1685 = vmax.xlane.f32.xlu0 %v1684
    %v1686 = vpop.xlane.xlu0 %1685
    %v1687 = vsub.f32 %v1683, %v1686
    %v1688 = vmul.f32 %v1687, 1.442695
    %v1689 = vpow.pop %v1688
    %v1690 = vsel %vm156, %v1689, 0.0
    %1691 = vadd.xlane.f32.xlu0 %v1690
    %v1692 = vpop.xlane.xlu0 %1691
    %v1693 = vrcp.pop %v1692
    %v1694 = vmul.f32 %v1689, %v1693
    %1695 = vrot.lane.b32.xlu0 %v144, 48
    %v1696 = vpop.permute.xlu0 %1695
    %v1699 = vsel %vm156, %v1694, 0
    %1701 = vmatprep.subr.mxu0 0.0
    %1702 = vmatpush1.msra.mxu0 %v1696
    %1703 = vmatprep.subr.mxu0 0.0
    %1704 = vmatpush1.msra.mxu0 0.0
    %1705 = vmatprep.subr.mxu0 0.0
    %1706 = vmatpush1.msra.mxu0 0.0
    %1707 = vmatprep.subr.mxu0 0.0
    %1708 = vmatpush1.msra.mxu0 0.0
    %1709 = vmatprep.subr.mxu0 0.0
    %1710 = vmatpush1.msra.mxu0 0.0
    %1711 = vmatprep.subr.mxu0 0.0
    %1712 = vmatpush1.msra.mxu0 0.0
    %1713 = vmatprep.subr.mxu0 0.0
    %1714 = vmatpush1.msra.mxu0 0.0
    %1715 = vmatprep.subr.mxu0 0.0
    %1716 = vmatpush1.msra.mxu0 0.0
    %1717 = vmatprep.subr.mxu0 0.0
    %1718 = vmatpush1.msra.mxu0 0.0
    %1719 = vmatprep.subr.mxu0 0.0
    %1720 = vmatpush1.msra.mxu0 0.0
    %1721 = vmatprep.subr.mxu0 0.0
    %1722 = vmatpush1.msra.mxu0 0.0
    %1723 = vmatprep.subr.mxu0 0.0
    %1724 = vmatpush1.msra.mxu0 0.0
    %1725 = vmatprep.subr.mxu0 0.0
    %1726 = vmatpush1.msra.mxu0 0.0
    %1727 = vmatprep.subr.mxu0 0.0
    %1728 = vmatpush1.msra.mxu0 0.0
    %1729 = vmatprep.subr.mxu0 0.0
    %1730 = vmatpush1.msra.mxu0 0.0
    %1731 = vmatprep.subr.mxu0 0.0
    %1732 = vmatpush1.msra.mxu0 0.0
    %1733 = vmatprep.subr.mxu0 0.0
    %1734 = vmatpush1.msra.mxu0 0.0
    %1735 = vmatprep.subr.mxu0 0.0
    %1736 = vmatpush1.msra.mxu0 0.0
    %1737 = vmatprep.subr.mxu0 0.0
    %1738 = vmatpush1.msra.mxu0 0.0
    %1739 = vmatprep.subr.mxu0 0.0
    %1740 = vmatpush1.msra.mxu0 0.0
    %1741 = vmatprep.subr.mxu0 0.0
    %1742 = vmatpush1.msra.mxu0 0.0
    %1743 = vmatprep.subr.mxu0 0.0
    %1744 = vmatpush1.msra.mxu0 0.0
    %1745 = vmatprep.subr.mxu0 0.0
    %1746 = vmatpush1.msra.mxu0 0.0
    %1747 = vmatprep.subr.mxu0 0.0
    %1748 = vmatpush1.msra.mxu0 0.0
    %1749 = vmatprep.subr.mxu0 0.0
    %1750 = vmatpush1.msra.mxu0 0.0
    %1751 = vmatprep.subr.mxu0 0.0
    %1752 = vmatpush1.msra.mxu0 0.0
    %1753 = vmatprep.subr.mxu0 0.0
    %1754 = vmatpush1.msra.mxu0 0.0
    %1755 = vmatprep.subr.mxu0 0.0
    %1756 = vmatpush1.msra.mxu0 0.0
    %1757 = vmatprep.subr.mxu0 0.0
    %1758 = vmatpush1.msra.mxu0 0.0
    %1759 = vmatprep.subr.mxu0 0.0
    %1760 = vmatpush1.msra.mxu0 0.0
    %1761 = vmatprep.subr.mxu0 0.0
    %1762 = vmatpush1.msra.mxu0 0.0
    %1763 = vmatprep.subr.mxu0 0.0
    %1764 = vmatpush1.msra.mxu0 0.0
    %1765 = vmatprep.mubr.f32.mxu0 0.0
    %1766 = vmatmul.mubr.f32.gmra.mrb[0].mxu0 %v1699
    %v1767 = vpop.f32.mrb[0].mxu0
    %v1768 = vadd.f32 0.0, %v1767
    %v1769 = vpop.f32.mrb[0].mxu0
    %1770 = vdwg.mxu0
    %v1771 = vld [vmem:[%s800] sm:$0xff]
    %v1773 = vsel %vm156, %v1768, 0
    %1775 = vmatprep.subr.mxu0 0.0
    %1776 = vmatpush1.msra.mxu0 %v1771
    %1777 = vmatprep.subr.mxu0 0.0
    %1778 = vmatpush1.msra.mxu0 0.0
    %1779 = vmatprep.subr.mxu0 0.0
    %1780 = vmatpush1.msra.mxu0 0.0
    %1781 = vmatprep.subr.mxu0 0.0
    %1782 = vmatpush1.msra.mxu0 0.0
    %1783 = vmatprep.subr.mxu0 0.0
    %1784 = vmatpush1.msra.mxu0 0.0
    %1785 = vmatprep.subr.mxu0 0.0
    %1786 = vmatpush1.msra.mxu0 0.0
    %1787 = vmatprep.subr.mxu0 0.0
    %1788 = vmatpush1.msra.mxu0 0.0
    %1789 = vmatprep.subr.mxu0 0.0
    %1790 = vmatpush1.msra.mxu0 0.0
    %1791 = vmatprep.subr.mxu0 0.0
    %1792 = vmatpush1.msra.mxu0 0.0
    %1793 = vmatprep.subr.mxu0 0.0
    %1794 = vmatpush1.msra.mxu0 0.0
    %1795 = vmatprep.subr.mxu0 0.0
    %1796 = vmatpush1.msra.mxu0 0.0
    %1797 = vmatprep.subr.mxu0 0.0
    %1798 = vmatpush1.msra.mxu0 0.0
    %1799 = vmatprep.subr.mxu0 0.0
    %1800 = vmatpush1.msra.mxu0 0.0
    %1801 = vmatprep.subr.mxu0 0.0
    %1802 = vmatpush1.msra.mxu0 0.0
    %1803 = vmatprep.subr.mxu0 0.0
    %1804 = vmatpush1.msra.mxu0 0.0
    %1805 = vmatprep.subr.mxu0 0.0
    %1806 = vmatpush1.msra.mxu0 0.0
    %1807 = vmatprep.subr.mxu0 0.0
    %1808 = vmatpush1.msra.mxu0 0.0
    %1809 = vmatprep.subr.mxu0 0.0
    %1810 = vmatpush1.msra.mxu0 0.0
    %1811 = vmatprep.subr.mxu0 0.0
    %1812 = vmatpush1.msra.mxu0 0.0
    %1813 = vmatprep.subr.mxu0 0.0
    %1814 = vmatpush1.msra.mxu0 0.0
    %1815 = vmatprep.subr.mxu0 0.0
    %1816 = vmatpush1.msra.mxu0 0.0
    %1817 = vmatprep.subr.mxu0 0.0
    %1818 = vmatpush1.msra.mxu0 0.0
    %1819 = vmatprep.subr.mxu0 0.0
    %1820 = vmatpush1.msra.mxu0 0.0
    %1821 = vmatprep.subr.mxu0 0.0
    %1822 = vmatpush1.msra.mxu0 0.0
    %1823 = vmatprep.subr.mxu0 0.0
    %1824 = vmatpush1.msra.mxu0 0.0
    %1825 = vmatprep.subr.mxu0 0.0
    %1826 = vmatpush1.msra.mxu0 0.0
    %1827 = vmatprep.subr.mxu0 0.0
    %1828 = vmatpush1.msra.mxu0 0.0
    %1829 = vmatprep.subr.mxu0 0.0
    %1830 = vmatpush1.msra.mxu0 0.0
    %1831 = vmatprep.subr.mxu0 0.0
    %1832 = vmatpush1.msra.mxu0 0.0
    %1833 = vmatprep.subr.mxu0 0.0
    %1834 = vmatpush1.msra.mxu0 0.0
    %1835 = vmatprep.subr.mxu0 0.0
    %1836 = vmatpush1.msra.mxu0 0.0
    %1837 = vmatprep.subr.mxu0 0.0
    %1838 = vmatpush1.msra.mxu0 0.0
    %1839 = vmatprep.mubr.f32.mxu0 0.0
    %1840 = vmatmul.mubr.f32.gmra.mrb[0].mxu0 %v1773
    %v1841 = vpop.f32.mrb[0].mxu0
    %v1842 = vadd.f32 0.0, %v1841
    %v1843 = vpop.f32.mrb[0].mxu0
    %1844 = vdwg.mxu0
    %v1845 = vadd.f32 %v1602, %v1842
    %1846 = vrot.lane.b32.xlu0 %v144, 72
    %v1847 = vpop.permute.xlu0 %1846
    %1848 = vrot.lane.b32.xlu0 %v144, 104
    %v1849 = vpop.permute.xlu0 %1848
    %v1850 = vsel %vm156, %v1847, 0
    %v1852 = vsel %vm156, %v1849, 0
    %1854 = vmatprep.subr.mxu0 0.0
    %1855 = vmatpush1.xpose.msra.mxu0 %v1852
    %1856 = vmatprep.subr.mxu0 0.0
    %1857 = vmatpush1.xpose.msra.mxu0 0.0
    %1858 = vmatprep.subr.mxu0 0.0
    %1859 = vmatpush1.xpose.msra.mxu0 0.0
    %1860 = vmatprep.subr.mxu0 0.0
    %1861 = vmatpush1.xpose.msra.mxu0 0.0
    %1862 = vmatprep.subr.mxu0 0.0
    %1863 = vmatpush1.xpose.msra.mxu0 0.0
    %1864 = vmatprep.subr.mxu0 0.0
    %1865 = vmatpush1.xpose.msra.mxu0 0.0
    %1866 = vmatprep.subr.mxu0 0.0
    %1867 = vmatpush1.xpose.msra.mxu0 0.0
    %1868 = vmatprep.subr.mxu0 0.0
    %1869 = vmatpush1.xpose.msra.mxu0 0.0
    %1870 = vmatprep.subr.mxu0 0.0
    %1871 = vmatpush1.xpose.msra.mxu0 0.0
    %1872 = vmatprep.subr.mxu0 0.0
    %1873 = vmatpush1.xpose.msra.mxu0 0.0
    %1874 = vmatprep.subr.mxu0 0.0
    %1875 = vmatpush1.xpose.msra.mxu0 0.0
    %1876 = vmatprep.subr.mxu0 0.0
    %1877 = vmatpush1.xpose.msra.mxu0 0.0
    %1878 = vmatprep.subr.mxu0 0.0
    %1879 = vmatpush1.xpose.msra.mxu0 0.0
    %1880 = vmatprep.subr.mxu0 0.0
    %1881 = vmatpush1.xpose.msra.mxu0 0.0
    %1882 = vmatprep.subr.mxu0 0.0
    %1883 = vmatpush1.xpose.msra.mxu0 0.0
    %1884 = vmatprep.subr.mxu0 0.0
    %1885 = vmatpush1.xpose.msra.mxu0 0.0
    %1886 = vmatprep.subr.mxu0 0.0
    %1887 = vmatpush1.xpose.msra.mxu0 0.0
    %1888 = vmatprep.subr.mxu0 0.0
    %1889 = vmatpush1.xpose.msra.mxu0 0.0
    %1890 = vmatprep.subr.mxu0 0.0
    %1891 = vmatpush1.xpose.msra.mxu0 0.0
    %1892 = vmatprep.subr.mxu0 0.0
    %1893 = vmatpush1.xpose.msra.mxu0 0.0
    %1894 = vmatprep.subr.mxu0 0.0
    %1895 = vmatpush1.xpose.msra.mxu0 0.0
    %1896 = vmatprep.subr.mxu0 0.0
    %1897 = vmatpush1.xpose.msra.mxu0 0.0
    %1898 = vmatprep.subr.mxu0 0.0
    %1899 = vmatpush1.xpose.msra.mxu0 0.0
    %1900 = vmatprep.subr.mxu0 0.0
    %1901 = vmatpush1.xpose.msra.mxu0 0.0
    %1902 = vmatprep.subr.mxu0 0.0
    %1903 = vmatpush1.xpose.msra.mxu0 0.0
    %1904 = vmatprep.subr.mxu0 0.0
    %1905 = vmatpush1.xpose.msra.mxu0 0.0
    %1906 = vmatprep.subr.mxu0 0.0
    %1907 = vmatpush1.xpose.msra.mxu0 0.0
    %1908 = vmatprep.subr.mxu0 0.0
    %1909 = vmatpush1.xpose.msra.mxu0 0.0
    %1910 = vmatprep.subr.mxu0 0.0
    %1911 = vmatpush1.xpose.msra.mxu0 0.0
    %1912 = vmatprep.subr.mxu0 0.0
    %1913 = vmatpush1.xpose.msra.mxu0 0.0
    %1914 = vmatprep.subr.mxu0 0.0
    %1915 = vmatpush1.xpose.msra.mxu0 0.0
    %1916 = vmatprep.subr.mxu0 0.0
    %1917 = vmatpush1.xpose.msra.mxu0 0.0
    %1918 = vmatprep.mubr.f32.mxu0 0.0
    %1919 = vmatmul.mubr.f32.gmra.mrb[0].mxu0 %v1850
    %v1920 = vpop.f32.mrb[0].mxu0
    %v1921 = vadd.f32 0.0, %v1920
    %v1922 = vpop.f32.mrb[0].mxu0
    %1923 = vdwg.mxu0
    %v1924 = vsel %vm151, %v1921, -1e+30
    %v1925 = vsel %vm156, %v1924, -inf
    %1926 = vmax.xlane.f32.xlu0 %v1925
    %v1927 = vpop.xlane.xlu0 %1926
    %v1928 = vsub.f32 %v1924, %v1927
    %v1929 = vmul.f32 %v1928, 1.442695
    %v1930 = vpow.pop %v1929
    %v1931 = vsel %vm156, %v1930, 0.0
    %1932 = vadd.xlane.f32.xlu0 %v1931
    %v1933 = vpop.xlane.xlu0 %1932
    %v1934 = vrcp.pop %v1933
    %v1935 = vmul.f32 %v1930, %v1934
    %1936 = vrot.lane.b32.xlu0 %v144, 40
    %v1937 = vpop.permute.xlu0 %1936
    %v1940 = vsel %vm156, %v1935, 0
    %1942 = vmatprep.subr.mxu0 0.0
    %1943 = vmatpush1.msra.mxu0 %v1937
    %1944 = vmatprep.subr.mxu0 0.0
    %1945 = vmatpush1.msra.mxu0 0.0
    %1946 = vmatprep.subr.mxu0 0.0
    %1947 = vmatpush1.msra.mxu0 0.0
    %1948 = vmatprep.subr.mxu0 0.0
    %1949 = vmatpush1.msra.mxu0 0.0
    %1950 = vmatprep.subr.mxu0 0.0
    %1951 = vmatpush1.msra.mxu0 0.0
    %1952 = vmatprep.subr.mxu0 0.0
    %1953 = vmatpush1.msra.mxu0 0.0
    %1954 = vmatprep.subr.mxu0 0.0
    %1955 = vmatpush1.msra.mxu0 0.0
    %1956 = vmatprep.subr.mxu0 0.0
    %1957 = vmatpush1.msra.mxu0 0.0
    %1958 = vmatprep.subr.mxu0 0.0
    %1959 = vmatpush1.msra.mxu0 0.0
    %1960 = vmatprep.subr.mxu0 0.0
    %1961 = vmatpush1.msra.mxu0 0.0
    %1962 = vmatprep.subr.mxu0 0.0
    %1963 = vmatpush1.msra.mxu0 0.0
    %1964 = vmatprep.subr.mxu0 0.0
    %1965 = vmatpush1.msra.mxu0 0.0
    %1966 = vmatprep.subr.mxu0 0.0
    %1967 = vmatpush1.msra.mxu0 0.0
    %1968 = vmatprep.subr.mxu0 0.0
    %1969 = vmatpush1.msra.mxu0 0.0
    %1970 = vmatprep.subr.mxu0 0.0
    %1971 = vmatpush1.msra.mxu0 0.0
    %1972 = vmatprep.subr.mxu0 0.0
    %1973 = vmatpush1.msra.mxu0 0.0
    %1974 = vmatprep.subr.mxu0 0.0
    %1975 = vmatpush1.msra.mxu0 0.0
    %1976 = vmatprep.subr.mxu0 0.0
    %1977 = vmatpush1.msra.mxu0 0.0
    %1978 = vmatprep.subr.mxu0 0.0
    %1979 = vmatpush1.msra.mxu0 0.0
    %1980 = vmatprep.subr.mxu0 0.0
    %1981 = vmatpush1.msra.mxu0 0.0
    %1982 = vmatprep.subr.mxu0 0.0
    %1983 = vmatpush1.msra.mxu0 0.0
    %1984 = vmatprep.subr.mxu0 0.0
    %1985 = vmatpush1.msra.mxu0 0.0
    %1986 = vmatprep.subr.mxu0 0.0
    %1987 = vmatpush1.msra.mxu0 0.0
    %1988 = vmatprep.subr.mxu0 0.0
    %1989 = vmatpush1.msra.mxu0 0.0
    %1990 = vmatprep.subr.mxu0 0.0
    %1991 = vmatpush1.msra.mxu0 0.0
    %1992 = vmatprep.subr.mxu0 0.0
    %1993 = vmatpush1.msra.mxu0 0.0
    %1994 = vmatprep.subr.mxu0 0.0
    %1995 = vmatpush1.msra.mxu0 0.0
    %1996 = vmatprep.subr.mxu0 0.0
    %1997 = vmatpush1.msra.mxu0 0.0
    %1998 = vmatprep.subr.mxu0 0.0
    %1999 = vmatpush1.msra.mxu0 0.0
    %2000 = vmatprep.subr.mxu0 0.0
    %2001 = vmatpush1.msra.mxu0 0.0
    %2002 = vmatprep.subr.mxu0 0.0
    %2003 = vmatpush1.msra.mxu0 0.0
    %2004 = vmatprep.subr.mxu0 0.0
    %2005 = vmatpush1.msra.mxu0 0.0
    %2006 = vmatprep.mubr.f32.mxu0 0.0
    %2007 = vmatmul.mubr.f32.gmra.mrb[0].mxu0 %v1940
    %v2008 = vpop.f32.mrb[0].mxu0
    %v2009 = vadd.f32 0.0, %v2008
    %v2010 = vpop.f32.mrb[0].mxu0
    %2011 = vdwg.mxu0
    %v2012 = vld [vmem:[%s1042] sm:$0xff]
    %v2014 = vsel %vm156, %v2009, 0
    %2016 = vmatprep.subr.mxu0 0.0
    %2017 = vmatpush1.msra.mxu0 %v2012
    %2018 = vmatprep.subr.mxu0 0.0
    %2019 = vmatpush1.msra.mxu0 0.0
    %2020 = vmatprep.subr.mxu0 0.0
    %2021 = vmatpush1.msra.mxu0 0.0
    %2022 = vmatprep.subr.mxu0 0.0
    %2023 = vmatpush1.msra.mxu0 0.0
    %2024 = vmatprep.subr.mxu0 0.0
    %2025 = vmatpush1.msra.mxu0 0.0
    %2026 = vmatprep.subr.mxu0 0.0
    %2027 = vmatpush1.msra.mxu0 0.0
    %2028 = vmatprep.subr.mxu0 0.0
    %2029 = vmatpush1.msra.mxu0 0.0
    %2030 = vmatprep.subr.mxu0 0.0
    %2031 = vmatpush1.msra.mxu0 0.0
    %2032 = vmatprep.subr.mxu0 0.0
    %2033 = vmatpush1.msra.mxu0 0.0
    %2034 = vmatprep.subr.mxu0 0.0
    %2035 = vmatpush1.msra.mxu0 0.0
    %2036 = vmatprep.subr.mxu0 0.0
    %2037 = vmatpush1.msra.mxu0 0.0
    %2038 = vmatprep.subr.mxu0 0.0
    %2039 = vmatpush1.msra.mxu0 0.0
    %2040 = vmatprep.subr.mxu0 0.0
    %2041 = vmatpush1.msra.mxu0 0.0
    %2042 = vmatprep.subr.mxu0 0.0
    %2043 = vmatpush1.msra.mxu0 0.0
    %2044 = vmatprep.subr.mxu0 0.0
    %2045 = vmatpush1.msra.mxu0 0.0
    %2046 = vmatprep.subr.mxu0 0.0
    %2047 = vmatpush1.msra.mxu0 0.0
    %2048 = vmatprep.subr.mxu0 0.0
    %2049 = vmatpush1.msra.mxu0 0.0
    %2050 = vmatprep.subr.mxu0 0.0
    %2051 = vmatpush1.msra.mxu0 0.0
    %2052 = vmatprep.subr.mxu0 0.0
    %2053 = vmatpush1.msra.mxu0 0.0
    %2054 = vmatprep.subr.mxu0 0.0
    %2055 = vmatpush1.msra.mxu0 0.0
    %2056 = vmatprep.subr.mxu0 0.0
    %2057 = vmatpush1.msra.mxu0 0.0
    %2058 = vmatprep.subr.mxu0 0.0
    %2059 = vmatpush1.msra.mxu0 0.0
    %2060 = vmatprep.subr.mxu0 0.0
    %2061 = vmatpush1.msra.mxu0 0.0
    %2062 = vmatprep.subr.mxu0 0.0
    %2063 = vmatpush1.msra.mxu0 0.0
    %2064 = vmatprep.subr.mxu0 0.0
    %2065 = vmatpush1.msra.mxu0 0.0
    %2066 = vmatprep.subr.mxu0 0.0
    %2067 = vmatpush1.msra.mxu0 0.0
    %2068 = vmatprep.subr.mxu0 0.0
    %2069 = vmatpush1.msra.mxu0 0.0
    %2070 = vmatprep.subr.mxu0 0.0
    %2071 = vmatpush1.msra.mxu0 0.0
    %2072 = vmatprep.subr.mxu0 0.0
    %2073 = vmatpush1.msra.mxu0 0.0
    %2074 = vmatprep.subr.mxu0 0.0
    %2075 = vmatpush1.msra.mxu0 0.0
    %2076 = vmatprep.subr.mxu0 0.0
    %2077 = vmatpush1.msra.mxu0 0.0
    %2078 = vmatprep.subr.mxu0 0.0
    %2079 = vmatpush1.msra.mxu0 0.0
    %2080 = vmatprep.mubr.f32.mxu0 0.0
    %2081 = vmatmul.mubr.f32.gmra.mrb[0].mxu0 %v2014
    %v2082 = vpop.f32.mrb[0].mxu0
    %v2083 = vadd.f32 0.0, %v2082
    %v2084 = vpop.f32.mrb[0].mxu0
    %2085 = vdwg.mxu0
    %v2086 = vadd.f32 %v1845, %v2083
    %v2087 = vadd.f32 %v2086, %v1122
    %2088 = vst.msk [vmem:[#allocation8 + $0x8] sm:$0xff] %vm65, %v2087
    // Predicated region
    $region30: #{tpu_custom_call.1} parent=1 // pred_check
      _
    $region31: #{tpu_custom_call.1} parent=1 // pred_check_branch
      %2090 = sbr.rel (0) target = $region33
    $region32: #{tpu_custom_call.1} parent=1 // pred_region
      %s2092 = ssub.s32 256, 256
      %2093 = vsyncadd [#allocation4], %s2092
      %s2094 = sshll.u32 [#allocation8], 4
      %s2095 = int_to_ptr.vmem [resolvable:$true] %s2094
      %2100 = dma.vmem_to_hbm [thread:$0]  %s2095, 256, %s4, [#allocation4], 128, 128, 8
    $region33: #{tpu_custom_call.1} parent=1 // pred_fallthru
      _
    // Predicated region
    $region34: #{tpu_custom_call.1} parent=1 // pred_check
      _
    $region35: #{tpu_custom_call.1} parent=1 // pred_check_branch
      %2102 = sbr.rel (0) target = $region37
    $region36: #{tpu_custom_call.1} parent=1 // pred_region
      %2103 = dma.done [#allocation4], 256
    $region37: #{tpu_custom_call.1} parent=1 // pred_fallthru
      _
    %2104 = vsyncpa [#allocation3], 1
    %2105 = vsyncpa [#allocation6], 1
    %2106 = vsyncpa [#allocation4], 1

</llo_original>
